<compile_context>
chip_gen: v7x
topology: tpu7x:2x2x1
jax: 0.10.0
libtpu: 0.0.40
codegen_flags: <defaults>
</compile_context>

<pallas_src>
import functools

import jax
import jax.numpy as jnp
import numpy as np
from jax import lax
from jax.experimental import pallas as pl
from jax.experimental.pallas import tpu as pltpu


# ---------------------------------------------------------------------------
# Pallas kernel: fused conv (as K*K shifted matmuls) + bias + activation.
# ---------------------------------------------------------------------------
def _conv_bias_act_kernel(x_ref, w_ref, b_ref, o_ref, *, K, stride, oh_tile, ow, act):
    # x_ref: (1, Hp, Wp, Cin) f32     w_ref: (K, K, Cin, Cout) bf16
    # b_ref: (Cout, 1) f32            o_ref: (1, Cout, oh_tile*ow) f32
    cin = w_ref.shape[2]
    cout = w_ref.shape[3]
    mt = oh_tile * ow
    row0 = pl.program_id(1) * (oh_tile * stride)

    acc = jnp.zeros((mt, cout), jnp.float32)
    for kh in range(K):
        for kw in range(K):
            if stride == 1:
                rows = pl.ds(row0 + kh, oh_tile)
                cols = pl.ds(kw, ow)
            else:
                rows = pl.ds(row0 + kh, oh_tile, stride)
                cols = pl.ds(kw, ow, stride)
            patch = x_ref[0, rows, cols, :]                     # (oh_tile, ow, Cin)
            patch = patch.reshape(mt, cin).astype(jnp.bfloat16)
            acc = acc + jnp.dot(patch, w_ref[kh, kw],
                                preferred_element_type=jnp.float32)

    out = acc.T + b_ref[...]                                    # (Cout, mt) lane-dense
    if act == "relu":
        out = jnp.maximum(out, 0.0)
    elif act != "identity":
        raise ValueError(act)
    o_ref[0] = out.astype(o_ref.dtype)


# ---------------------------------------------------------------------------
# Wrapper: CNNLayer.forward == activation(Conv2d(x) + bias)
# ---------------------------------------------------------------------------
@functools.partial(jax.jit, static_argnames=("stride", "padding", "act"))
def cnn_layer_forward(x_nchw, weight, bias, *, stride=1, padding=0, act="relu"):
    """x_nchw: (B, Cin, H, W); weight: (Cout, Cin, K, K); bias: (Cout,).
    Returns (B, Cout, OH, OW) f32 in NCHW, matching the PyTorch module."""
    B, Cin, H, W = x_nchw.shape
    Cout, _, K, _ = weight.shape
    OH = (H + 2 * padding - K) // stride + 1
    OW = (W + 2 * padding - K) // stride + 1
    Hp, Wp = H + 2 * padding, W + 2 * padding
    M = OH * OW

    # NCHW -> NHWC (channels on lanes for the patch matmuls) + zero padding.
    xh = jnp.transpose(x_nchw, (0, 2, 3, 1)).astype(jnp.float32)
    xh = jnp.pad(xh, ((0, 0), (padding, padding), (padding, padding), (0, 0)))

    # PyTorch OIHW -> (K, K, Cin, Cout), bf16 for the MXU.
    wk = jnp.transpose(weight, (2, 3, 1, 0)).astype(jnp.bfloat16)
    b2 = bias.astype(jnp.float32).reshape(Cout, 1)

    # Output-row tile: flattened spatial tile is a multiple of 128 lanes and
    # divides OH exactly (no row padding / tail slicing needed).
    oh_tile = OH
    for cand in range(1, OH + 1):
        if OH % cand == 0 and (cand * OW) % 128 == 0:
            oh_tile = cand
            break
    mt = oh_tile * OW
    n_m = OH // oh_tile

    kernel = functools.partial(_conv_bias_act_kernel, K=K, stride=stride,
                               oh_tile=oh_tile, ow=OW, act=act)
    out = pl.pallas_call(
        kernel,
        out_shape=jax.ShapeDtypeStruct((B, Cout, M), jnp.float32),
        grid=(B, n_m),
        in_specs=[
            pl.BlockSpec((1, Hp, Wp, Cin), lambda bi, mi: (bi, 0, 0, 0)),
            pl.BlockSpec((K, K, Cin, Cout), lambda bi, mi: (0, 0, 0, 0)),
            pl.BlockSpec((Cout, 1), lambda bi, mi: (0, 0)),
        ],
        out_specs=pl.BlockSpec((1, Cout, mt), lambda bi, mi: (bi, 0, mi)),
        compiler_params=pltpu.CompilerParams(
            dimension_semantics=("parallel", "parallel")),
    )(xh, wk, b2)
    return out.reshape(B, Cout, OH, OW)


# ---------------------------------------------------------------------------
# Pure-JAX reference (same numeric recipe: bf16 operands, f32 accumulation)
# ---------------------------------------------------------------------------
def reference_forward(x_nchw, weight, bias, stride, padding):
    y = lax.conv_general_dilated(
        x_nchw.astype(jnp.bfloat16), weight.astype(jnp.bfloat16),
        window_strides=(stride, stride),
        padding=[(padding, padding), (padding, padding)],
        dimension_numbers=("NCHW", "OIHW", "NCHW"),
        preferred_element_type=jnp.float32,
    )
    y = y + bias.astype(jnp.float32)[None, :, None, None]
    return jnp.maximum(y, 0.0)


if __name__ == "__main__":
    key = jax.random.PRNGKey(0)
    k_w, k_b, k_x = jax.random.split(key, 3)

    # Small shapes consistent with CNNLayer(input_channels, output_channels, k):
    B, Cin, H, W = 2, 32, 16, 16
    Cout, K, stride, padding = 64, 3, 1, 1

    fan_in = Cin * K * K
    bound = 1.0 / np.sqrt(fan_in)  # PyTorch Conv2d default init bounds
    weight = jax.random.uniform(k_w, (Cout, Cin, K, K), jnp.float32, -bound, bound)
    bias = jax.random.uniform(k_b, (Cout,), jnp.float32, -bound, bound)
    x = jax.random.normal(k_x, (B, Cin, H, W), dtype=jnp.float32)

    out = cnn_layer_forward(x, weight, bias, stride=stride, padding=padding, act="relu")
    out = jax.block_until_ready(out)

    ref = jax.block_until_ready(reference_forward(x, weight, bias, stride, padding))
    assert out.shape == (B, Cout, H, W), out.shape
    np.testing.assert_allclose(np.asarray(out), np.asarray(ref), atol=1e-2, rtol=1e-2)

    print("KERNEL_OK")
</pallas_src>

<mosaic_0001>
module attributes {stable_mosaic.version = 11 : i64} {
  func.func @_conv_bias_act_kernel(%arg0: i32, %arg1: i32, %arg2: memref<1x18x18x32xf32, #tpu.memory_space<vmem>>, %arg3: memref<3x3x32x64xbf16, #tpu.memory_space<vmem>>, %arg4: memref<64x1xf32, #tpu.memory_space<vmem>>, %arg5: memref<1x64x128xf32, #tpu.memory_space<vmem>>) attributes {dimension_semantics = [#tpu.dimension_semantics<parallel>, #tpu.dimension_semantics<parallel>], iteration_bounds = array<i64: 2, 2>, scalar_prefetch = 0 : i64, scratch_operands = 0 : i64, tpu.core_type = #tpu.core_type<tc>, window_params = [{transform_indices = @transform_0, window_bounds = array<i64: 1, 18, 18, 32>}, {pipeline_mode = #tpu.pipeline_mode<synchronous>, transform_indices = @transform_1, window_bounds = array<i64: 3, 3, 32, 64>}, {pipeline_mode = #tpu.pipeline_mode<synchronous>, transform_indices = @transform_2, window_bounds = array<i64: 64, 1>}, {transform_indices = @transform_3, window_bounds = array<i64: 1, 64, 128>}]} {
    %c8_i32 = arith.constant 8 : i32
    %0 = arith.muli %arg1, %c8_i32 : i32
    %cst = arith.constant 0.000000e+00 : f32
    %1 = vector.broadcast %cst : f32 to vector<128x64xf32>
    %c0_i32 = arith.constant 0 : i32
    %2 = arith.addi %0, %c0_i32 : i32
    %c0 = arith.constant 0 : index
    %3 = arith.index_cast %2 : i32 to index
    %c0_0 = arith.constant 0 : index
    %c0_1 = arith.constant 0 : index
    %4 = vector.load %arg2[%c0, %3, %c0_0, %c0_1] : memref<1x18x18x32xf32, #tpu.memory_space<vmem>>, vector<1x8x16x32xf32>
    %5 = vector.shape_cast %4 : vector<1x8x16x32xf32> to vector<8x16x32xf32>
    %6 = vector.shape_cast %5 : vector<8x16x32xf32> to vector<128x32xf32>
    %7 = arith.truncf %6 : vector<128x32xf32> to vector<128x32xbf16>
    %c0_2 = arith.constant 0 : index
    %c0_3 = arith.constant 0 : index
    %c0_4 = arith.constant 0 : index
    %c0_5 = arith.constant 0 : index
    %8 = vector.load %arg3[%c0_2, %c0_3, %c0_4, %c0_5] : memref<3x3x32x64xbf16, #tpu.memory_space<vmem>>, vector<1x1x32x64xbf16>
    %9 = vector.shape_cast %8 : vector<1x1x32x64xbf16> to vector<32x64xbf16>
    %cst_6 = arith.constant dense<0.000000e+00> : vector<128x64xf32>
    %10 = tpu.matmul %7, %9, %cst_6 {dimension_numbers = #tpu.dot_dimension_numbers<[1], [0], [0], [1], [0, 0, 1, 1], [], []>} : vector<128x32xbf16>, vector<32x64xbf16>, vector<128x64xf32> -> vector<128x64xf32>
    %11 = arith.addf %1, %10 : vector<128x64xf32>
    %c0_i32_7 = arith.constant 0 : i32
    %12 = arith.addi %0, %c0_i32_7 : i32
    %c0_8 = arith.constant 0 : index
    %13 = arith.index_cast %12 : i32 to index
    %c1 = arith.constant 1 : index
    %c0_9 = arith.constant 0 : index
    %14 = vector.load %arg2[%c0_8, %13, %c1, %c0_9] : memref<1x18x18x32xf32, #tpu.memory_space<vmem>>, vector<1x8x16x32xf32>
    %15 = vector.shape_cast %14 : vector<1x8x16x32xf32> to vector<8x16x32xf32>
    %16 = vector.shape_cast %15 : vector<8x16x32xf32> to vector<128x32xf32>
    %17 = arith.truncf %16 : vector<128x32xf32> to vector<128x32xbf16>
    %c0_10 = arith.constant 0 : index
    %c1_11 = arith.constant 1 : index
    %c0_12 = arith.constant 0 : index
    %c0_13 = arith.constant 0 : index
    %18 = vector.load %arg3[%c0_10, %c1_11, %c0_12, %c0_13] : memref<3x3x32x64xbf16, #tpu.memory_space<vmem>>, vector<1x1x32x64xbf16>
    %19 = vector.shape_cast %18 : vector<1x1x32x64xbf16> to vector<32x64xbf16>
    %cst_14 = arith.constant dense<0.000000e+00> : vector<128x64xf32>
    %20 = tpu.matmul %17, %19, %cst_14 {dimension_numbers = #tpu.dot_dimension_numbers<[1], [0], [0], [1], [0, 0, 1, 1], [], []>} : vector<128x32xbf16>, vector<32x64xbf16>, vector<128x64xf32> -> vector<128x64xf32>
    %21 = arith.addf %11, %20 : vector<128x64xf32>
    %c0_i32_15 = arith.constant 0 : i32
    %22 = arith.addi %0, %c0_i32_15 : i32
    %c0_16 = arith.constant 0 : index
    %23 = arith.index_cast %22 : i32 to index
    %c2 = arith.constant 2 : index
    %c0_17 = arith.constant 0 : index
    %24 = vector.load %arg2[%c0_16, %23, %c2, %c0_17] : memref<1x18x18x32xf32, #tpu.memory_space<vmem>>, vector<1x8x16x32xf32>
    %25 = vector.shape_cast %24 : vector<1x8x16x32xf32> to vector<8x16x32xf32>
    %26 = vector.shape_cast %25 : vector<8x16x32xf32> to vector<128x32xf32>
    %27 = arith.truncf %26 : vector<128x32xf32> to vector<128x32xbf16>
    %c0_18 = arith.constant 0 : index
    %c2_19 = arith.constant 2 : index
    %c0_20 = arith.constant 0 : index
    %c0_21 = arith.constant 0 : index
    %28 = vector.load %arg3[%c0_18, %c2_19, %c0_20, %c0_21] : memref<3x3x32x64xbf16, #tpu.memory_space<vmem>>, vector<1x1x32x64xbf16>
    %29 = vector.shape_cast %28 : vector<1x1x32x64xbf16> to vector<32x64xbf16>
    %cst_22 = arith.constant dense<0.000000e+00> : vector<128x64xf32>
    %30 = tpu.matmul %27, %29, %cst_22 {dimension_numbers = #tpu.dot_dimension_numbers<[1], [0], [0], [1], [0, 0, 1, 1], [], []>} : vector<128x32xbf16>, vector<32x64xbf16>, vector<128x64xf32> -> vector<128x64xf32>
    %31 = arith.addf %21, %30 : vector<128x64xf32>
    %c1_i32 = arith.constant 1 : i32
    %32 = arith.addi %0, %c1_i32 : i32
    %c0_23 = arith.constant 0 : index
    %33 = arith.index_cast %32 : i32 to index
    %c0_24 = arith.constant 0 : index
    %c0_25 = arith.constant 0 : index
    %34 = vector.load %arg2[%c0_23, %33, %c0_24, %c0_25] : memref<1x18x18x32xf32, #tpu.memory_space<vmem>>, vector<1x8x16x32xf32>
    %35 = vector.shape_cast %34 : vector<1x8x16x32xf32> to vector<8x16x32xf32>
    %36 = vector.shape_cast %35 : vector<8x16x32xf32> to vector<128x32xf32>
    %37 = arith.truncf %36 : vector<128x32xf32> to vector<128x32xbf16>
    %c1_26 = arith.constant 1 : index
    %c0_27 = arith.constant 0 : index
    %c0_28 = arith.constant 0 : index
    %c0_29 = arith.constant 0 : index
    %38 = vector.load %arg3[%c1_26, %c0_27, %c0_28, %c0_29] : memref<3x3x32x64xbf16, #tpu.memory_space<vmem>>, vector<1x1x32x64xbf16>
    %39 = vector.shape_cast %38 : vector<1x1x32x64xbf16> to vector<32x64xbf16>
    %cst_30 = arith.constant dense<0.000000e+00> : vector<128x64xf32>
    %40 = tpu.matmul %37, %39, %cst_30 {dimension_numbers = #tpu.dot_dimension_numbers<[1], [0], [0], [1], [0, 0, 1, 1], [], []>} : vector<128x32xbf16>, vector<32x64xbf16>, vector<128x64xf32> -> vector<128x64xf32>
    %41 = arith.addf %31, %40 : vector<128x64xf32>
    %c1_i32_31 = arith.constant 1 : i32
    %42 = arith.addi %0, %c1_i32_31 : i32
    %c0_32 = arith.constant 0 : index
    %43 = arith.index_cast %42 : i32 to index
    %c1_33 = arith.constant 1 : index
    %c0_34 = arith.constant 0 : index
    %44 = vector.load %arg2[%c0_32, %43, %c1_33, %c0_34] : memref<1x18x18x32xf32, #tpu.memory_space<vmem>>, vector<1x8x16x32xf32>
    %45 = vector.shape_cast %44 : vector<1x8x16x32xf32> to vector<8x16x32xf32>
    %46 = vector.shape_cast %45 : vector<8x16x32xf32> to vector<128x32xf32>
    %47 = arith.truncf %46 : vector<128x32xf32> to vector<128x32xbf16>
    %c1_35 = arith.constant 1 : index
    %c1_36 = arith.constant 1 : index
    %c0_37 = arith.constant 0 : index
    %c0_38 = arith.constant 0 : index
    %48 = vector.load %arg3[%c1_35, %c1_36, %c0_37, %c0_38] : memref<3x3x32x64xbf16, #tpu.memory_space<vmem>>, vector<1x1x32x64xbf16>
    %49 = vector.shape_cast %48 : vector<1x1x32x64xbf16> to vector<32x64xbf16>
    %cst_39 = arith.constant dense<0.000000e+00> : vector<128x64xf32>
    %50 = tpu.matmul %47, %49, %cst_39 {dimension_numbers = #tpu.dot_dimension_numbers<[1], [0], [0], [1], [0, 0, 1, 1], [], []>} : vector<128x32xbf16>, vector<32x64xbf16>, vector<128x64xf32> -> vector<128x64xf32>
    %51 = arith.addf %41, %50 : vector<128x64xf32>
    %c1_i32_40 = arith.constant 1 : i32
    %52 = arith.addi %0, %c1_i32_40 : i32
    %c0_41 = arith.constant 0 : index
    %53 = arith.index_cast %52 : i32 to index
    %c2_42 = arith.constant 2 : index
    %c0_43 = arith.constant 0 : index
    %54 = vector.load %arg2[%c0_41, %53, %c2_42, %c0_43] : memref<1x18x18x32xf32, #tpu.memory_space<vmem>>, vector<1x8x16x32xf32>
    %55 = vector.shape_cast %54 : vector<1x8x16x32xf32> to vector<8x16x32xf32>
    %56 = vector.shape_cast %55 : vector<8x16x32xf32> to vector<128x32xf32>
    %57 = arith.truncf %56 : vector<128x32xf32> to vector<128x32xbf16>
    %c1_44 = arith.constant 1 : index
    %c2_45 = arith.constant 2 : index
    %c0_46 = arith.constant 0 : index
    %c0_47 = arith.constant 0 : index
    %58 = vector.load %arg3[%c1_44, %c2_45, %c0_46, %c0_47] : memref<3x3x32x64xbf16, #tpu.memory_space<vmem>>, vector<1x1x32x64xbf16>
    %59 = vector.shape_cast %58 : vector<1x1x32x64xbf16> to vector<32x64xbf16>
    %cst_48 = arith.constant dense<0.000000e+00> : vector<128x64xf32>
    %60 = tpu.matmul %57, %59, %cst_48 {dimension_numbers = #tpu.dot_dimension_numbers<[1], [0], [0], [1], [0, 0, 1, 1], [], []>} : vector<128x32xbf16>, vector<32x64xbf16>, vector<128x64xf32> -> vector<128x64xf32>
    %61 = arith.addf %51, %60 : vector<128x64xf32>
    %c2_i32 = arith.constant 2 : i32
    %62 = arith.addi %0, %c2_i32 : i32
    %c0_49 = arith.constant 0 : index
    %63 = arith.index_cast %62 : i32 to index
    %c0_50 = arith.constant 0 : index
    %c0_51 = arith.constant 0 : index
    %64 = vector.load %arg2[%c0_49, %63, %c0_50, %c0_51] : memref<1x18x18x32xf32, #tpu.memory_space<vmem>>, vector<1x8x16x32xf32>
    %65 = vector.shape_cast %64 : vector<1x8x16x32xf32> to vector<8x16x32xf32>
    %66 = vector.shape_cast %65 : vector<8x16x32xf32> to vector<128x32xf32>
    %67 = arith.truncf %66 : vector<128x32xf32> to vector<128x32xbf16>
    %c2_52 = arith.constant 2 : index
    %c0_53 = arith.constant 0 : index
    %c0_54 = arith.constant 0 : index
    %c0_55 = arith.constant 0 : index
    %68 = vector.load %arg3[%c2_52, %c0_53, %c0_54, %c0_55] : memref<3x3x32x64xbf16, #tpu.memory_space<vmem>>, vector<1x1x32x64xbf16>
    %69 = vector.shape_cast %68 : vector<1x1x32x64xbf16> to vector<32x64xbf16>
    %cst_56 = arith.constant dense<0.000000e+00> : vector<128x64xf32>
    %70 = tpu.matmul %67, %69, %cst_56 {dimension_numbers = #tpu.dot_dimension_numbers<[1], [0], [0], [1], [0, 0, 1, 1], [], []>} : vector<128x32xbf16>, vector<32x64xbf16>, vector<128x64xf32> -> vector<128x64xf32>
    %71 = arith.addf %61, %70 : vector<128x64xf32>
    %c2_i32_57 = arith.constant 2 : i32
    %72 = arith.addi %0, %c2_i32_57 : i32
    %c0_58 = arith.constant 0 : index
    %73 = arith.index_cast %72 : i32 to index
    %c1_59 = arith.constant 1 : index
    %c0_60 = arith.constant 0 : index
    %74 = vector.load %arg2[%c0_58, %73, %c1_59, %c0_60] : memref<1x18x18x32xf32, #tpu.memory_space<vmem>>, vector<1x8x16x32xf32>
    %75 = vector.shape_cast %74 : vector<1x8x16x32xf32> to vector<8x16x32xf32>
    %76 = vector.shape_cast %75 : vector<8x16x32xf32> to vector<128x32xf32>
    %77 = arith.truncf %76 : vector<128x32xf32> to vector<128x32xbf16>
    %c2_61 = arith.constant 2 : index
    %c1_62 = arith.constant 1 : index
    %c0_63 = arith.constant 0 : index
    %c0_64 = arith.constant 0 : index
    %78 = vector.load %arg3[%c2_61, %c1_62, %c0_63, %c0_64] : memref<3x3x32x64xbf16, #tpu.memory_space<vmem>>, vector<1x1x32x64xbf16>
    %79 = vector.shape_cast %78 : vector<1x1x32x64xbf16> to vector<32x64xbf16>
    %cst_65 = arith.constant dense<0.000000e+00> : vector<128x64xf32>
    %80 = tpu.matmul %77, %79, %cst_65 {dimension_numbers = #tpu.dot_dimension_numbers<[1], [0], [0], [1], [0, 0, 1, 1], [], []>} : vector<128x32xbf16>, vector<32x64xbf16>, vector<128x64xf32> -> vector<128x64xf32>
    %81 = arith.addf %71, %80 : vector<128x64xf32>
    %c2_i32_66 = arith.constant 2 : i32
    %82 = arith.addi %0, %c2_i32_66 : i32
    %c0_67 = arith.constant 0 : index
    %83 = arith.index_cast %82 : i32 to index
    %c2_68 = arith.constant 2 : index
    %c0_69 = arith.constant 0 : index
    %84 = vector.load %arg2[%c0_67, %83, %c2_68, %c0_69] : memref<1x18x18x32xf32, #tpu.memory_space<vmem>>, vector<1x8x16x32xf32>
    %85 = vector.shape_cast %84 : vector<1x8x16x32xf32> to vector<8x16x32xf32>
    %86 = vector.shape_cast %85 : vector<8x16x32xf32> to vector<128x32xf32>
    %87 = arith.truncf %86 : vector<128x32xf32> to vector<128x32xbf16>
    %c2_70 = arith.constant 2 : index
    %c2_71 = arith.constant 2 : index
    %c0_72 = arith.constant 0 : index
    %c0_73 = arith.constant 0 : index
    %88 = vector.load %arg3[%c2_70, %c2_71, %c0_72, %c0_73] : memref<3x3x32x64xbf16, #tpu.memory_space<vmem>>, vector<1x1x32x64xbf16>
    %89 = vector.shape_cast %88 : vector<1x1x32x64xbf16> to vector<32x64xbf16>
    %cst_74 = arith.constant dense<0.000000e+00> : vector<128x64xf32>
    %90 = tpu.matmul %87, %89, %cst_74 {dimension_numbers = #tpu.dot_dimension_numbers<[1], [0], [0], [1], [0, 0, 1, 1], [], []>} : vector<128x32xbf16>, vector<32x64xbf16>, vector<128x64xf32> -> vector<128x64xf32>
    %91 = arith.addf %81, %90 : vector<128x64xf32>
    %92 = tpu.transpose %91, [1, 0] : vector<128x64xf32> -> vector<64x128xf32>
    %c0_75 = arith.constant 0 : index
    %c0_76 = arith.constant 0 : index
    %93 = vector.load %arg4[%c0_75, %c0_76] : memref<64x1xf32, #tpu.memory_space<vmem>>, vector<64x1xf32>
    %94 = vector.broadcast %93 : vector<64x1xf32> to vector<64x128xf32>
    %95 = arith.addf %92, %94 : vector<64x128xf32>
    %cst_77 = arith.constant 0.000000e+00 : f32
    %96 = vector.broadcast %cst_77 : f32 to vector<64x128xf32>
    %97 = arith.maximumf %95, %96 : vector<64x128xf32>
    %c0_78 = arith.constant 0 : index
    %c0_79 = arith.constant 0 : index
    %c0_80 = arith.constant 0 : index
    %98 = vector.load %arg5[%c0_78, %c0_79, %c0_80] : memref<1x64x128xf32, #tpu.memory_space<vmem>>, vector<1x64x128xf32>
    %99 = vector.shape_cast %98 : vector<1x64x128xf32> to vector<64x128xf32>
    %100 = vector.shape_cast %97 : vector<64x128xf32> to vector<1x64x128xf32>
    tpu.vector_store %arg5[%c0_78, %c0_79, %c0_80], %100 {strides = array<i32>} : memref<1x64x128xf32, #tpu.memory_space<vmem>>, vector<1x64x128xf32>,
    return
  }
  func.func @transform_0(%arg0: i32, %arg1: i32) -> (i32, i32, i32, i32) {
    %c0_i32 = arith.constant 0 : i32
    %c0_i32_0 = arith.constant 0 : i32
    %c0_i32_1 = arith.constant 0 : i32
    %c0_i32_2 = arith.constant 0 : i32
    return %arg0, %c0_i32, %c0_i32_0, %c0_i32_1 : i32, i32, i32, i32
  }
  func.func @transform_1(%arg0: i32, %arg1: i32) -> (i32, i32, i32, i32) {
    %c0_i32 = arith.constant 0 : i32
    %c0_i32_0 = arith.constant 0 : i32
    %c0_i32_1 = arith.constant 0 : i32
    %c0_i32_2 = arith.constant 0 : i32
    %c0_i32_3 = arith.constant 0 : i32
    return %c0_i32, %c0_i32_0, %c0_i32_1, %c0_i32_2 : i32, i32, i32, i32
  }
  func.func @transform_2(%arg0: i32, %arg1: i32) -> (i32, i32) {
    %c0_i32 = arith.constant 0 : i32
    %c0_i32_0 = arith.constant 0 : i32
    %c0_i32_1 = arith.constant 0 : i32
    return %c0_i32, %c0_i32_0 : i32, i32
  }
  func.func @transform_3(%arg0: i32, %arg1: i32) -> (i32, i32, i32) {
    %c0_i32 = arith.constant 0 : i32
    %c0_i32_0 = arith.constant 0 : i32
    return %arg0, %c0_i32, %arg1 : i32, i32, i32
  }
}

</mosaic_0001>

<llo_original>
// kernel: cnn_layer_forward.1
$region0: #{cnn_layer_forward.1}
  #allocation0 [shape = 'u32[]', space=smem, size = 0x4, offset = 0x4, fixed_abs, tag = 'smem constant byte address 0x4 - core index']
  #allocation1 [shape = 'u32[144,128]{1,0:T(1,128)}', space=vmem, size = 0x12000, scoped, tag = 'internal scratch']
  %s0 = inlined_call_operand.vmem [shape: f32[2,18,18,32], index: 0, kind: input, shape index: {}]
  %s1 = inlined_call_operand.vmem [shape: bf16[3,3,32,64], index: 1, kind: input, shape index: {}]
  %s2 = inlined_call_operand.vmem [shape: f32[64,1], index: 2, kind: input, shape index: {}]
  %s3 = inlined_call_operand.vmem [shape: f32[2,64,256], index: 3, kind: output, shape index: {}]
  %s4 = sld [smem:[#allocation0]]
  $region79: #{cnn_layer_forward.1} parent=0
    _
  %s6 = ssub.s32 1, %s4
  %s7 = scalar_select 0, %s6, %s4
  $region1: #{cnn_layer_forward.1} parent=0
    #allocation2 [shape = 'u8[65536]{0}', space=vmem, size = 0x10000, scoped, tag = 'output window, operand 0']
    loop: start=0, step=1, limit=6
    $region2: #{cnn_layer_forward.1} parent=1 // loop_pre_header
      _
    $region3: #{cnn_layer_forward.1} parent=1 // loop_header
      %s9 = sphi 0, %s13
      %p10 = scmp.ge.s32.totalorder %s9, 6
      %s16 = sphi 0, %s28
      %s17 = sphi 0, %s24
      %s18 = sphi 0, %s16
      %s19 = sphi 0, %s17
      %s20 = sphi 0, %s18
      %s21 = sphi 0, %s19
      %s31 = sphi 0, %s33
      %s34 = sphi 0, %s31
      %s35 = sphi 0, %s34
      %s51 = sphi 0, %s35
      %s55 = sphi 0, %s55
      %s57 = sphi 0, %s55
      %s58 = sphi 0, %s57
      %s72 = sphi 0, %s58
      %s76 = sphi 0, %s76
      %s78 = sphi 0, %s76
      %s79 = sphi 0, %s78
      %s93 = sphi 0, %s79
      %s101 = sphi 0, %s103
      %s104 = sphi 0, %s101
      %s105 = sphi 0, %s104
      %s121 = sphi 0, %s105
    $region4: #{cnn_layer_forward.1} parent=1 // loop_header_branch
      %12 = sbr.rel (%p10) target = $region8
    $region5: #{cnn_layer_forward.1} parent=1 // loop_body
      %s14 = ssub.s32 %s9, 1
      %s15 = ssub.s32 %s9, 2
      %s22 = sadd.s32 1, %s17
      %p23 = scmp.ge.s32.totalorder %s22, 2
      %s24 = scalar_select %p23, 0, %s22
      %s25 = sadd.s32 1, %s16
      %s26 = scalar_select %p23, %s25, %s16
      %p27 = scmp.ge.s32.totalorder %s26, 2
      %s28 = scalar_select %p27, 0, %s26
      %s29 = ssub.s32 %s16, %s28
      %p30 = scmp.eq.s32.totalorder %s29, 0
      %s32 = sadd.s32 %s31, 1
      %s33 = scalar_select %p30, %s31, %s32
      %p36 = pneg %p30
      %p37 = scmp.eq.s32.totalorder %s9, 3
      %p38 = por %p36, %p37
      %p39 = scmp.ne.s32.totalorder %s31, %s34
      %p40 = scmp.eq.s32.totalorder %s9, 0
      %p41 = por %p39, %p40
      %p42 = scmp.ne.s32.totalorder %s31, %s34
      %p43 = scmp.eq.s32.totalorder %s14, 3
      %p44 = por %p42, %p43
      %p45 = scmp.ne.s32.totalorder %s34, %s35
      %p46 = scmp.eq.s32.totalorder %s14, 0
      %p47 = por %p45, %p46
      %p48 = scmp.ne.s32.totalorder %s34, %s35
      %p49 = scmp.eq.s32.totalorder %s15, 3
      %p50 = por %p48, %p49
      %p52 = scmp.ne.s32.totalorder %s35, %s51
      %p53 = scmp.eq.s32.totalorder %s15, 0
      %p54 = por %p52, %p53
      %s56 = sadd.s32 %s55, 1
      %p59 = scmp.eq.s32.totalorder %s9, 3
      %p60 = scmp.ne.s32.totalorder %s55, %s57
      %p61 = scmp.eq.s32.totalorder %s9, 0
      %p62 = por %p60, %p61
      %p63 = scmp.ne.s32.totalorder %s55, %s57
      %p64 = scmp.eq.s32.totalorder %s14, 3
      %p65 = por %p63, %p64
      %p66 = scmp.ne.s32.totalorder %s57, %s58
      %p67 = scmp.eq.s32.totalorder %s14, 0
      %p68 = por %p66, %p67
      %p69 = scmp.ne.s32.totalorder %s57, %s58
      %p70 = scmp.eq.s32.totalorder %s15, 3
      %p71 = por %p69, %p70
      %p73 = scmp.ne.s32.totalorder %s58, %s72
      %p74 = scmp.eq.s32.totalorder %s15, 0
      %p75 = por %p73, %p74
      %s77 = sadd.s32 %s76, 1
      %p80 = scmp.eq.s32.totalorder %s9, 3
      %p81 = scmp.ne.s32.totalorder %s76, %s78
      %p82 = scmp.eq.s32.totalorder %s9, 0
      %p83 = por %p81, %p82
      %p84 = scmp.ne.s32.totalorder %s76, %s78
      %p85 = scmp.eq.s32.totalorder %s14, 3
      %p86 = por %p84, %p85
      %p87 = scmp.ne.s32.totalorder %s78, %s79
      %p88 = scmp.eq.s32.totalorder %s14, 0
      %p89 = por %p87, %p88
      %p90 = scmp.ne.s32.totalorder %s78, %s79
      %p91 = scmp.eq.s32.totalorder %s15, 3
      %p92 = por %p90, %p91
      %p94 = scmp.ne.s32.totalorder %s79, %s93
      %p95 = scmp.eq.s32.totalorder %s15, 0
      %p96 = por %p94, %p95
      %s97 = ssub.s32 %s16, %s28
      %s98 = ssub.s32 %s17, %s24
      %s99 = sor.u32 %s97, %s98
      %p100 = scmp.eq.s32.totalorder %s99, 0
      %s102 = sadd.s32 %s101, 1
      %s103 = scalar_select %p100, %s101, %s102
      %p106 = pneg %p100
      %p107 = scmp.eq.s32.totalorder %s9, 3
      %p108 = por %p106, %p107
      %p109 = scmp.ne.s32.totalorder %s101, %s104
      %p110 = scmp.eq.s32.totalorder %s9, 0
      %p111 = por %p109, %p110
      %p112 = scmp.ne.s32.totalorder %s101, %s104
      %p113 = scmp.eq.s32.totalorder %s14, 3
      %p114 = por %p112, %p113
      %p115 = scmp.ne.s32.totalorder %s104, %s105
      %p116 = scmp.eq.s32.totalorder %s14, 0
      %p117 = por %p115, %p116
      %p118 = scmp.ne.s32.totalorder %s104, %s105
      %p119 = scmp.eq.s32.totalorder %s15, 3
      %p120 = por %p118, %p119
      %p122 = scmp.ne.s32.totalorder %s105, %s121
      %p123 = scmp.eq.s32.totalorder %s15, 0
      %p124 = por %p122, %p123
      %p125 = scmp.le.s32.totalorder 1, %s9
      %p126 = scmp.lt.s32.totalorder %s9, 5
      %p127 = pnand %p125, %p126
      %p128 = pneg %p127
      // Predicated region
      $region9: #{cnn_layer_forward.1} parent=5 // pred_check
        _
      $region10: #{cnn_layer_forward.1} parent=5 // pred_check_branch
        %130 = sbr.rel (%p127) target = $region12
      $region11: #{cnn_layer_forward.1} parent=5 // pred_region
        %s131 = ssub.s32 %s9, 1
        // Predicated region
        $region13: #{cnn_layer_forward.1} parent=11 // pred_check
          %p132 = pneg %p68
        $region14: #{cnn_layer_forward.1} parent=11 // pred_check_branch
          %134 = sbr.rel (%p132) target = $region16
        $region15: #{cnn_layer_forward.1} parent=11 // pred_region
          _
        $region16: #{cnn_layer_forward.1} parent=11 // pred_fallthru
          _
        // Predicated region
        $region17: #{cnn_layer_forward.1} parent=11 // pred_check
          %p135 = pneg %p89
        $region18: #{cnn_layer_forward.1} parent=11 // pred_check_branch
          %137 = sbr.rel (%p135) target = $region20
        $region19: #{cnn_layer_forward.1} parent=11 // pred_region
          _
        $region20: #{cnn_layer_forward.1} parent=11 // pred_fallthru
          _
      $region12: #{cnn_layer_forward.1} parent=5 // pred_fallthru
        _
      %p138 = scmp.lt.s32.totalorder %s9, 4
      // Predicated region
      $region21: #{cnn_layer_forward.1} parent=5 // pred_check
        %p139 = pneg %p138
      $region22: #{cnn_layer_forward.1} parent=5 // pred_check_branch
        %141 = sbr.rel (%p139) target = $region24
      $region23: #{cnn_layer_forward.1} parent=5 // pred_region
        // Predicated region
        $region25: #{cnn_layer_forward.1} parent=23 // pred_check
          %p142 = pneg %p41
        $region26: #{cnn_layer_forward.1} parent=23 // pred_check_branch
          %144 = sbr.rel (%p142) target = $region28
        $region27: #{cnn_layer_forward.1} parent=23 // pred_region
          %p145 = scmp.lt.s32.totalorder %s16, 1
          %s146 = scalar_select %p145, %s16, 1
          %s147 = smul.addr %s146, 54
          %s148 = smul.addr %s147, 8
          %s149 = scalar_lea.vmem %s0, %s148
        $region28: #{cnn_layer_forward.1} parent=23 // pred_fallthru
          _
      $region24: #{cnn_layer_forward.1} parent=5 // pred_fallthru
        _
      %p150 = scmp.le.s32.totalorder 1, %s9
      %p151 = scmp.lt.s32.totalorder %s9, 5
      %p152 = pnand %p150, %p151
      %p153 = pneg %p152
      // Predicated region
      $region29: #{cnn_layer_forward.1} parent=5 // pred_check
        _
      $region30: #{cnn_layer_forward.1} parent=5 // pred_check_branch
        %155 = sbr.rel (%p152) target = $region32
      $region31: #{cnn_layer_forward.1} parent=5 // pred_region
        %s156 = ssub.s32 %s9, 1
        %p157 = scmp.lt.s32.totalorder %s18, 1
        %s158 = scalar_select %p157, %s18, 1
        %s159 = smul.addr %s158, 54
        %s160 = smul.addr %s159, 8
        %s161 = scalar_lea.vmem %s0, %s160
        %p162 = pneg %p47
        %p163 = pneg %p44
        %p164 = pneg %p68
        %p165 = pneg %p65
        %p166 = pneg %p89
        %p167 = pneg %p86
        %p168 = pneg %p117
        %p169 = pneg %p114
        %s170 = sand.u32 %s104, 1
        %s171 = sand.u32 %s104, 1
        %s172 = smul.addr %s171, 64
        %s173 = scalar_lea.vmem [#allocation2], %s172
        %p174 = scmp.lt.s32.totalorder %s18, 1
        %s175 = scalar_select %p174, %s18, 1
        %s176 = smul.addr %s175, 54
        %s177 = smul.addr %s176, 8
        %s178 = scalar_lea.vmem %s0, %s177
        %s180 = smul.u32 %s19, 8
        %s181 = smul.u32 %s180, 24
        %s182 = scalar_lea.vmem %s178, %s181
        %v183 = vld [vmem:[%s182] sm:$0xff]
        %v184 = vld [vmem:[%s182 + $0x8] sm:$0xff]
        %v185 = vld [vmem:[%s182 + $0x18] sm:$0xff]
        %v186 = vld [vmem:[%s182 + $0x20] sm:$0xff]
        %v187 = vld [vmem:[%s182 + $0x30] sm:$0xff]
        %v188 = vld [vmem:[%s182 + $0x38] sm:$0xff]
        %v189 = vld [vmem:[%s182 + $0x48] sm:$0xff]
        %v190 = vld [vmem:[%s182 + $0x50] sm:$0xff]
        %v191 = vld [vmem:[%s182 + $0x60] sm:$0xff]
        %v192 = vld [vmem:[%s182 + $0x68] sm:$0xff]
        %v193 = vld [vmem:[%s182 + $0x78] sm:$0xff]
        %v194 = vld [vmem:[%s182 + $0x80] sm:$0xff]
        %v195 = vld [vmem:[%s182 + $0x90] sm:$0xff]
        %v196 = vld [vmem:[%s182 + $0x98] sm:$0xff]
        %v197 = vld [vmem:[%s182 + $0xa8] sm:$0xff]
        %v198 = vld [vmem:[%s182 + $0xb0] sm:$0xff]
        %v199 = vpack.c.bf16 %v184, %v183
        %v200 = vpack.c.bf16 %v186, %v185
        %v201 = vpack.c.bf16 %v188, %v187
        %v202 = vpack.c.bf16 %v190, %v189
        %v203 = vpack.c.bf16 %v192, %v191
        %v204 = vpack.c.bf16 %v194, %v193
        %v205 = vpack.c.bf16 %v196, %v195
        %v206 = vpack.c.bf16 %v198, %v197
        %v207 = vld [vmem:[%s1] sm:$0xf]
        %v208 = vld [vmem:[%s1 + $0x4] sm:$0xf]
        %v209 = vld [vmem:[%s1 + $0x8] sm:$0xf]
        %v210 = vld [vmem:[%s1 + $0xc] sm:$0xf]
        %v211 = vld [vmem:[%s182 + $0x1] sm:$0xff]
        %v212 = vld [vmem:[%s182 + $0x9] sm:$0xff]
        %v213 = vld [vmem:[%s182 + $0x19] sm:$0xff]
        %v214 = vld [vmem:[%s182 + $0x21] sm:$0xff]
        %v215 = vld [vmem:[%s182 + $0x31] sm:$0xff]
        %v216 = vld [vmem:[%s182 + $0x39] sm:$0xff]
        %v217 = vld [vmem:[%s182 + $0x49] sm:$0xff]
        %v218 = vld [vmem:[%s182 + $0x51] sm:$0xff]
        %v219 = vld [vmem:[%s182 + $0x61] sm:$0xff]
        %v220 = vld [vmem:[%s182 + $0x69] sm:$0xff]
        %v221 = vld [vmem:[%s182 + $0x79] sm:$0xff]
        %v222 = vld [vmem:[%s182 + $0x81] sm:$0xff]
        %v223 = vld [vmem:[%s182 + $0x91] sm:$0xff]
        %v224 = vld [vmem:[%s182 + $0x99] sm:$0xff]
        %v225 = vld [vmem:[%s182 + $0xa9] sm:$0xff]
        %v226 = vld [vmem:[%s182 + $0xb1] sm:$0xff]
        %v227 = vpack.c.bf16 %v212, %v211
        %v228 = vpack.c.bf16 %v214, %v213
        %v229 = vpack.c.bf16 %v216, %v215
        %v230 = vpack.c.bf16 %v218, %v217
        %v231 = vpack.c.bf16 %v220, %v219
        %v232 = vpack.c.bf16 %v222, %v221
        %v233 = vpack.c.bf16 %v224, %v223
        %v234 = vpack.c.bf16 %v226, %v225
        %s235 = scalar_lea.vmem %s1, 16
        %v236 = vld [vmem:[%s235] sm:$0xf]
        %v237 = vld [vmem:[%s235 + $0x4] sm:$0xf]
        %v238 = vld [vmem:[%s235 + $0x8] sm:$0xf]
        %v239 = vld [vmem:[%s235 + $0xc] sm:$0xf]
        %v244 = vunpack.c.l.b16 %v236
        %v245 = vunpack.c.l.b16 %v237
        %v246 = vunpack.c.l.b16 %v238
        %v247 = vunpack.c.l.b16 %v239
        %v248 = vpack.c.b16 %v245, %v244
        %v249 = vpack.c.b16 %v247, %v246
        %vm252 = vcmask 261120
        %v254 = vsel %vm252, %v227, 0
        %v257 = vsel %vm252, %v228, 0
        %v260 = vsel %vm252, %v229, 0
        %v263 = vsel %vm252, %v230, 0
        %v266 = vsel %vm252, %v231, 0
        %v269 = vsel %vm252, %v232, 0
        %v272 = vsel %vm252, %v233, 0
        %v275 = vsel %vm252, %v234, 0
        %277 = vmatprep.subr.bf16.mxu0 0
        %278 = vmatpush1.bf16.msra.mxu0 %v248
        %279 = vmatprep.subr.bf16.mxu0 0
        %280 = vmatpush1.bf16.msra.mxu0 %v249
        %281 = vmatprep.subr.bf16.mxu0 0
        %282 = vmatpush1.bf16.msra.mxu0 0
        %283 = vmatprep.subr.bf16.mxu0 0
        %284 = vmatpush1.bf16.msra.mxu0 0
        %285 = vmatprep.subr.bf16.mxu0 0
        %286 = vmatpush1.bf16.msra.mxu0 0
        %287 = vmatprep.subr.bf16.mxu0 0
        %288 = vmatpush1.bf16.msra.mxu0 0
        %289 = vmatprep.subr.bf16.mxu0 0
        %290 = vmatpush1.bf16.msra.mxu0 0
        %291 = vmatprep.subr.bf16.mxu0 0
        %292 = vmatpush1.bf16.msra.mxu0 0
        %293 = vmatprep.subr.bf16.mxu0 0
        %294 = vmatpush1.bf16.msra.mxu0 0
        %295 = vmatprep.subr.bf16.mxu0 0
        %296 = vmatpush1.bf16.msra.mxu0 0
        %297 = vmatprep.subr.bf16.mxu0 0
        %298 = vmatpush1.bf16.msra.mxu0 0
        %299 = vmatprep.subr.bf16.mxu0 0
        %300 = vmatpush1.bf16.msra.mxu0 0
        %301 = vmatprep.subr.bf16.mxu0 0
        %302 = vmatpush1.bf16.msra.mxu0 0
        %303 = vmatprep.subr.bf16.mxu0 0
        %304 = vmatpush1.bf16.msra.mxu0 0
        %305 = vmatprep.subr.bf16.mxu0 0
        %306 = vmatpush1.bf16.msra.mxu0 0
        %307 = vmatprep.subr.bf16.mxu0 0
        %308 = vmatpush1.bf16.msra.mxu0 0
        %309 = vmatprep.mubr.bf16.mxu0 0
        %310 = vmatmul.mubr.bf16.gmra.mrb[0].mxu0 %v254
        %v311 = vpop.f32.mrb[0].mxu0
        %v312 = vadd.f32 0.0, %v311
        %v313 = vpop.f32.mrb[0].mxu0
        %v314 = vpop.f32.mrb[0].mxu0
        %v315 = vadd.f32 0.0, %v314
        %v316 = vpop.f32.mrb[0].mxu0
        %317 = vmatprep.mubr.bf16.mxu0 0
        %318 = vmatmul.mubr.bf16.gmra.mrb[0].mxu0 %v257
        %v319 = vpop.f32.mrb[0].mxu0
        %v320 = vadd.f32 0.0, %v319
        %v321 = vpop.f32.mrb[0].mxu0
        %v322 = vpop.f32.mrb[0].mxu0
        %v323 = vadd.f32 0.0, %v322
        %v324 = vpop.f32.mrb[0].mxu0
        %325 = vmatprep.mubr.bf16.mxu0 0
        %326 = vmatmul.mubr.bf16.gmra.mrb[0].mxu0 %v260
        %v327 = vpop.f32.mrb[0].mxu0
        %v328 = vadd.f32 0.0, %v327
        %v329 = vpop.f32.mrb[0].mxu0
        %v330 = vpop.f32.mrb[0].mxu0
        %v331 = vadd.f32 0.0, %v330
        %v332 = vpop.f32.mrb[0].mxu0
        %333 = vmatprep.mubr.bf16.mxu0 0
        %334 = vmatmul.mubr.bf16.gmra.mrb[0].mxu0 %v263
        %v335 = vpop.f32.mrb[0].mxu0
        %v336 = vadd.f32 0.0, %v335
        %v337 = vpop.f32.mrb[0].mxu0
        %v338 = vpop.f32.mrb[0].mxu0
        %v339 = vadd.f32 0.0, %v338
        %v340 = vpop.f32.mrb[0].mxu0
        %341 = vmatprep.mubr.bf16.mxu0 0
        %342 = vmatmul.mubr.bf16.gmra.mrb[0].mxu0 %v266
        %v343 = vpop.f32.mrb[0].mxu0
        %v344 = vadd.f32 0.0, %v343
        %v345 = vpop.f32.mrb[0].mxu0
        %v346 = vpop.f32.mrb[0].mxu0
        %v347 = vadd.f32 0.0, %v346
        %v348 = vpop.f32.mrb[0].mxu0
        %349 = vmatprep.mubr.bf16.mxu0 0
        %350 = vmatmul.mubr.bf16.gmra.mrb[0].mxu0 %v269
        %v351 = vpop.f32.mrb[0].mxu0
        %v352 = vadd.f32 0.0, %v351
        %v353 = vpop.f32.mrb[0].mxu0
        %v354 = vpop.f32.mrb[0].mxu0
        %v355 = vadd.f32 0.0, %v354
        %v356 = vpop.f32.mrb[0].mxu0
        %357 = vmatprep.mubr.bf16.mxu0 0
        %358 = vmatmul.mubr.bf16.gmra.mrb[0].mxu0 %v272
        %v359 = vpop.f32.mrb[0].mxu0
        %v360 = vadd.f32 0.0, %v359
        %v361 = vpop.f32.mrb[0].mxu0
        %v362 = vpop.f32.mrb[0].mxu0
        %v363 = vadd.f32 0.0, %v362
        %v364 = vpop.f32.mrb[0].mxu0
        %365 = vmatprep.mubr.bf16.mxu0 0
        %366 = vmatmul.mubr.bf16.gmra.mrb[0].mxu0 %v275
        %v367 = vpop.f32.mrb[0].mxu0
        %v368 = vadd.f32 0.0, %v367
        %v369 = vpop.f32.mrb[0].mxu0
        %v370 = vpop.f32.mrb[0].mxu0
        %v371 = vadd.f32 0.0, %v370
        %v372 = vpop.f32.mrb[0].mxu0
        %373 = vdwg.mxu0
        %v378 = vunpack.c.l.b16 %v207
        %v379 = vunpack.c.l.b16 %v208
        %v380 = vunpack.c.l.b16 %v209
        %v381 = vunpack.c.l.b16 %v210
        %v382 = vpack.c.b16 %v379, %v378
        %v383 = vpack.c.b16 %v381, %v380
        %v387 = vsel %vm252, %v199, 0
        %v390 = vsel %vm252, %v200, 0
        %v393 = vsel %vm252, %v201, 0
        %v396 = vsel %vm252, %v202, 0
        %v399 = vsel %vm252, %v203, 0
        %v402 = vsel %vm252, %v204, 0
        %v405 = vsel %vm252, %v205, 0
        %v408 = vsel %vm252, %v206, 0
        %410 = vmatprep.subr.bf16.mxu0 0
        %411 = vmatpush1.bf16.msra.mxu0 %v382
        %412 = vmatprep.subr.bf16.mxu0 0
        %413 = vmatpush1.bf16.msra.mxu0 %v383
        %414 = vmatprep.subr.bf16.mxu0 0
        %415 = vmatpush1.bf16.msra.mxu0 0
        %416 = vmatprep.subr.bf16.mxu0 0
        %417 = vmatpush1.bf16.msra.mxu0 0
        %418 = vmatprep.subr.bf16.mxu0 0
        %419 = vmatpush1.bf16.msra.mxu0 0
        %420 = vmatprep.subr.bf16.mxu0 0
        %421 = vmatpush1.bf16.msra.mxu0 0
        %422 = vmatprep.subr.bf16.mxu0 0
        %423 = vmatpush1.bf16.msra.mxu0 0
        %424 = vmatprep.subr.bf16.mxu0 0
        %425 = vmatpush1.bf16.msra.mxu0 0
        %426 = vmatprep.subr.bf16.mxu0 0
        %427 = vmatpush1.bf16.msra.mxu0 0
        %428 = vmatprep.subr.bf16.mxu0 0
        %429 = vmatpush1.bf16.msra.mxu0 0
        %430 = vmatprep.subr.bf16.mxu0 0
        %431 = vmatpush1.bf16.msra.mxu0 0
        %432 = vmatprep.subr.bf16.mxu0 0
        %433 = vmatpush1.bf16.msra.mxu0 0
        %434 = vmatprep.subr.bf16.mxu0 0
        %435 = vmatpush1.bf16.msra.mxu0 0
        %436 = vmatprep.subr.bf16.mxu0 0
        %437 = vmatpush1.bf16.msra.mxu0 0
        %438 = vmatprep.subr.bf16.mxu0 0
        %439 = vmatpush1.bf16.msra.mxu0 0
        %440 = vmatprep.subr.bf16.mxu0 0
        %441 = vmatpush1.bf16.msra.mxu0 0
        %442 = vmatprep.mubr.bf16.mxu0 0
        %443 = vmatmul.mubr.bf16.gmra.mrb[0].mxu0 %v387
        %v444 = vpop.f32.mrb[0].mxu0
        %v445 = vadd.f32 %v312, %v444
        %v446 = vpop.f32.mrb[0].mxu0
        %v447 = vpop.f32.mrb[0].mxu0
        %v448 = vadd.f32 %v315, %v447
        %v449 = vpop.f32.mrb[0].mxu0
        %450 = vmatprep.mubr.bf16.mxu0 0
        %451 = vmatmul.mubr.bf16.gmra.mrb[0].mxu0 %v390
        %v452 = vpop.f32.mrb[0].mxu0
        %v453 = vadd.f32 %v320, %v452
        %v454 = vpop.f32.mrb[0].mxu0
        %v455 = vpop.f32.mrb[0].mxu0
        %v456 = vadd.f32 %v323, %v455
        %v457 = vpop.f32.mrb[0].mxu0
        %458 = vmatprep.mubr.bf16.mxu0 0
        %459 = vmatmul.mubr.bf16.gmra.mrb[0].mxu0 %v393
        %v460 = vpop.f32.mrb[0].mxu0
        %v461 = vadd.f32 %v328, %v460
        %v462 = vpop.f32.mrb[0].mxu0
        %v463 = vpop.f32.mrb[0].mxu0
        %v464 = vadd.f32 %v331, %v463
        %v465 = vpop.f32.mrb[0].mxu0
        %466 = vmatprep.mubr.bf16.mxu0 0
        %467 = vmatmul.mubr.bf16.gmra.mrb[0].mxu0 %v396
        %v468 = vpop.f32.mrb[0].mxu0
        %v469 = vadd.f32 %v336, %v468
        %v470 = vpop.f32.mrb[0].mxu0
        %v471 = vpop.f32.mrb[0].mxu0
        %v472 = vadd.f32 %v339, %v471
        %v473 = vpop.f32.mrb[0].mxu0
        %474 = vmatprep.mubr.bf16.mxu0 0
        %475 = vmatmul.mubr.bf16.gmra.mrb[0].mxu0 %v399
        %v476 = vpop.f32.mrb[0].mxu0
        %v477 = vadd.f32 %v344, %v476
        %v478 = vpop.f32.mrb[0].mxu0
        %v479 = vpop.f32.mrb[0].mxu0
        %v480 = vadd.f32 %v347, %v479
        %v481 = vpop.f32.mrb[0].mxu0
        %482 = vmatprep.mubr.bf16.mxu0 0
        %483 = vmatmul.mubr.bf16.gmra.mrb[0].mxu0 %v402
        %v484 = vpop.f32.mrb[0].mxu0
        %v485 = vadd.f32 %v352, %v484
        %v486 = vpop.f32.mrb[0].mxu0
        %v487 = vpop.f32.mrb[0].mxu0
        %v488 = vadd.f32 %v355, %v487
        %v489 = vpop.f32.mrb[0].mxu0
        %490 = vmatprep.mubr.bf16.mxu0 0
        %491 = vmatmul.mubr.bf16.gmra.mrb[0].mxu0 %v405
        %v492 = vpop.f32.mrb[0].mxu0
        %v493 = vadd.f32 %v360, %v492
        %v494 = vpop.f32.mrb[0].mxu0
        %v495 = vpop.f32.mrb[0].mxu0
        %v496 = vadd.f32 %v363, %v495
        %v497 = vpop.f32.mrb[0].mxu0
        %498 = vmatprep.mubr.bf16.mxu0 0
        %499 = vmatmul.mubr.bf16.gmra.mrb[0].mxu0 %v408
        %v500 = vpop.f32.mrb[0].mxu0
        %v501 = vadd.f32 %v368, %v500
        %v502 = vpop.f32.mrb[0].mxu0
        %v503 = vpop.f32.mrb[0].mxu0
        %v504 = vadd.f32 %v371, %v503
        %v505 = vpop.f32.mrb[0].mxu0
        %506 = vdwg.mxu0
        %v507 = vld [vmem:[%s182 + $0x2] sm:$0xff]
        %v508 = vld [vmem:[%s182 + $0xa] sm:$0xff]
        %v509 = vld [vmem:[%s182 + $0x1a] sm:$0xff]
        %v510 = vld [vmem:[%s182 + $0x22] sm:$0xff]
        %v511 = vld [vmem:[%s182 + $0x32] sm:$0xff]
        %v512 = vld [vmem:[%s182 + $0x3a] sm:$0xff]
        %v513 = vld [vmem:[%s182 + $0x4a] sm:$0xff]
        %v514 = vld [vmem:[%s182 + $0x52] sm:$0xff]
        %v515 = vld [vmem:[%s182 + $0x62] sm:$0xff]
        %v516 = vld [vmem:[%s182 + $0x6a] sm:$0xff]
        %v517 = vld [vmem:[%s182 + $0x7a] sm:$0xff]
        %v518 = vld [vmem:[%s182 + $0x82] sm:$0xff]
        %v519 = vld [vmem:[%s182 + $0x92] sm:$0xff]
        %v520 = vld [vmem:[%s182 + $0x9a] sm:$0xff]
        %v521 = vld [vmem:[%s182 + $0xaa] sm:$0xff]
        %v522 = vld [vmem:[%s182 + $0xb2] sm:$0xff]
        %v523 = vpack.c.bf16 %v508, %v507
        %v524 = vpack.c.bf16 %v510, %v509
        %v525 = vpack.c.bf16 %v512, %v511
        %v526 = vpack.c.bf16 %v514, %v513
        %v527 = vpack.c.bf16 %v516, %v515
        %v528 = vpack.c.bf16 %v518, %v517
        %v529 = vpack.c.bf16 %v520, %v519
        %v530 = vpack.c.bf16 %v522, %v521
        %s531 = scalar_lea.vmem %s1, 32
        %v532 = vld [vmem:[%s531] sm:$0xf]
        %v533 = vld [vmem:[%s531 + $0x4] sm:$0xf]
        %v534 = vld [vmem:[%s531 + $0x8] sm:$0xf]
        %v535 = vld [vmem:[%s531 + $0xc] sm:$0xf]
        %v540 = vunpack.c.l.b16 %v532
        %v541 = vunpack.c.l.b16 %v533
        %v542 = vunpack.c.l.b16 %v534
        %v543 = vunpack.c.l.b16 %v535
        %v544 = vpack.c.b16 %v541, %v540
        %v545 = vpack.c.b16 %v543, %v542
        %v549 = vsel %vm252, %v523, 0
        %v552 = vsel %vm252, %v524, 0
        %v555 = vsel %vm252, %v525, 0
        %v558 = vsel %vm252, %v526, 0
        %v561 = vsel %vm252, %v527, 0
        %v564 = vsel %vm252, %v528, 0
        %v567 = vsel %vm252, %v529, 0
        %v570 = vsel %vm252, %v530, 0
        %572 = vmatprep.subr.bf16.mxu0 0
        %573 = vmatpush1.bf16.msra.mxu0 %v544
        %574 = vmatprep.subr.bf16.mxu0 0
        %575 = vmatpush1.bf16.msra.mxu0 %v545
        %576 = vmatprep.subr.bf16.mxu0 0
        %577 = vmatpush1.bf16.msra.mxu0 0
        %578 = vmatprep.subr.bf16.mxu0 0
        %579 = vmatpush1.bf16.msra.mxu0 0
        %580 = vmatprep.subr.bf16.mxu0 0
        %581 = vmatpush1.bf16.msra.mxu0 0
        %582 = vmatprep.subr.bf16.mxu0 0
        %583 = vmatpush1.bf16.msra.mxu0 0
        %584 = vmatprep.subr.bf16.mxu0 0
        %585 = vmatpush1.bf16.msra.mxu0 0
        %586 = vmatprep.subr.bf16.mxu0 0
        %587 = vmatpush1.bf16.msra.mxu0 0
        %588 = vmatprep.subr.bf16.mxu0 0
        %589 = vmatpush1.bf16.msra.mxu0 0
        %590 = vmatprep.subr.bf16.mxu0 0
        %591 = vmatpush1.bf16.msra.mxu0 0
        %592 = vmatprep.subr.bf16.mxu0 0
        %593 = vmatpush1.bf16.msra.mxu0 0
        %594 = vmatprep.subr.bf16.mxu0 0
        %595 = vmatpush1.bf16.msra.mxu0 0
        %596 = vmatprep.subr.bf16.mxu0 0
        %597 = vmatpush1.bf16.msra.mxu0 0
        %598 = vmatprep.subr.bf16.mxu0 0
        %599 = vmatpush1.bf16.msra.mxu0 0
        %600 = vmatprep.subr.bf16.mxu0 0
        %601 = vmatpush1.bf16.msra.mxu0 0
        %602 = vmatprep.subr.bf16.mxu0 0
        %603 = vmatpush1.bf16.msra.mxu0 0
        %604 = vmatprep.mubr.bf16.mxu0 0
        %605 = vmatmul.mubr.bf16.gmra.mrb[0].mxu0 %v549
        %v606 = vpop.f32.mrb[0].mxu0
        %v607 = vadd.f32 0.0, %v606
        %v608 = vpop.f32.mrb[0].mxu0
        %v609 = vpop.f32.mrb[0].mxu0
        %v610 = vadd.f32 0.0, %v609
        %v611 = vpop.f32.mrb[0].mxu0
        %612 = vmatprep.mubr.bf16.mxu0 0
        %613 = vmatmul.mubr.bf16.gmra.mrb[0].mxu0 %v552
        %v614 = vpop.f32.mrb[0].mxu0
        %v615 = vadd.f32 0.0, %v614
        %v616 = vpop.f32.mrb[0].mxu0
        %v617 = vpop.f32.mrb[0].mxu0
        %v618 = vadd.f32 0.0, %v617
        %v619 = vpop.f32.mrb[0].mxu0
        %620 = vmatprep.mubr.bf16.mxu0 0
        %621 = vmatmul.mubr.bf16.gmra.mrb[0].mxu0 %v555
        %v622 = vpop.f32.mrb[0].mxu0
        %v623 = vadd.f32 0.0, %v622
        %v624 = vpop.f32.mrb[0].mxu0
        %v625 = vpop.f32.mrb[0].mxu0
        %v626 = vadd.f32 0.0, %v625
        %v627 = vpop.f32.mrb[0].mxu0
        %628 = vmatprep.mubr.bf16.mxu0 0
        %629 = vmatmul.mubr.bf16.gmra.mrb[0].mxu0 %v558
        %v630 = vpop.f32.mrb[0].mxu0
        %v631 = vadd.f32 0.0, %v630
        %v632 = vpop.f32.mrb[0].mxu0
        %v633 = vpop.f32.mrb[0].mxu0
        %v634 = vadd.f32 0.0, %v633
        %v635 = vpop.f32.mrb[0].mxu0
        %636 = vmatprep.mubr.bf16.mxu0 0
        %637 = vmatmul.mubr.bf16.gmra.mrb[0].mxu0 %v561
        %v638 = vpop.f32.mrb[0].mxu0
        %v639 = vadd.f32 0.0, %v638
        %v640 = vpop.f32.mrb[0].mxu0
        %v641 = vpop.f32.mrb[0].mxu0
        %v642 = vadd.f32 0.0, %v641
        %v643 = vpop.f32.mrb[0].mxu0
        %644 = vmatprep.mubr.bf16.mxu0 0
        %645 = vmatmul.mubr.bf16.gmra.mrb[0].mxu0 %v564
        %v646 = vpop.f32.mrb[0].mxu0
        %v647 = vadd.f32 0.0, %v646
        %v648 = vpop.f32.mrb[0].mxu0
        %v649 = vpop.f32.mrb[0].mxu0
        %v650 = vadd.f32 0.0, %v649
        %v651 = vpop.f32.mrb[0].mxu0
        %652 = vmatprep.mubr.bf16.mxu0 0
        %653 = vmatmul.mubr.bf16.gmra.mrb[0].mxu0 %v567
        %v654 = vpop.f32.mrb[0].mxu0
        %v655 = vadd.f32 0.0, %v654
        %v656 = vpop.f32.mrb[0].mxu0
        %v657 = vpop.f32.mrb[0].mxu0
        %v658 = vadd.f32 0.0, %v657
        %v659 = vpop.f32.mrb[0].mxu0
        %660 = vmatprep.mubr.bf16.mxu0 0
        %661 = vmatmul.mubr.bf16.gmra.mrb[0].mxu0 %v570
        %v662 = vpop.f32.mrb[0].mxu0
        %v663 = vadd.f32 0.0, %v662
        %v664 = vpop.f32.mrb[0].mxu0
        %v665 = vpop.f32.mrb[0].mxu0
        %v666 = vadd.f32 0.0, %v665
        %v667 = vpop.f32.mrb[0].mxu0
        %668 = vdwg.mxu0
        %v669 = vadd.f32 %v445, %v607
        %v670 = vadd.f32 %v448, %v610
        %v671 = vadd.f32 %v453, %v615
        %v672 = vadd.f32 %v456, %v618
        %v673 = vadd.f32 %v461, %v623
        %v674 = vadd.f32 %v464, %v626
        %v675 = vadd.f32 %v469, %v631
        %v676 = vadd.f32 %v472, %v634
        %v677 = vadd.f32 %v477, %v639
        %v678 = vadd.f32 %v480, %v642
        %v679 = vadd.f32 %v485, %v647
        %v680 = vadd.f32 %v488, %v650
        %v681 = vadd.f32 %v493, %v655
        %v682 = vadd.f32 %v496, %v658
        %v683 = vadd.f32 %v501, %v663
        %v684 = vadd.f32 %v504, %v666
        %s685 = sadd.s32 %s180, 1
        %s686 = smul.u32 %s685, 24
        %s687 = scalar_lea.vmem %s178, %s686
        %v688 = vld [vmem:[%s687] sm:$0xff]
        %v689 = vld [vmem:[%s687 + $0x8] sm:$0xff]
        %v690 = vld [vmem:[%s687 + $0x18] sm:$0xff]
        %v691 = vld [vmem:[%s687 + $0x20] sm:$0xff]
        %v692 = vld [vmem:[%s687 + $0x30] sm:$0xff]
        %v693 = vld [vmem:[%s687 + $0x38] sm:$0xff]
        %v694 = vld [vmem:[%s687 + $0x48] sm:$0xff]
        %v695 = vld [vmem:[%s687 + $0x50] sm:$0xff]
        %v696 = vld [vmem:[%s687 + $0x60] sm:$0xff]
        %v697 = vld [vmem:[%s687 + $0x68] sm:$0xff]
        %v698 = vld [vmem:[%s687 + $0x78] sm:$0xff]
        %v699 = vld [vmem:[%s687 + $0x80] sm:$0xff]
        %v700 = vld [vmem:[%s687 + $0x90] sm:$0xff]
        %v701 = vld [vmem:[%s687 + $0x98] sm:$0xff]
        %v702 = vld [vmem:[%s687 + $0xa8] sm:$0xff]
        %v703 = vld [vmem:[%s687 + $0xb0] sm:$0xff]
        %v704 = vpack.c.bf16 %v689, %v688
        %v705 = vpack.c.bf16 %v691, %v690
        %v706 = vpack.c.bf16 %v693, %v692
        %v707 = vpack.c.bf16 %v695, %v694
        %v708 = vpack.c.bf16 %v697, %v696
        %v709 = vpack.c.bf16 %v699, %v698
        %v710 = vpack.c.bf16 %v701, %v700
        %v711 = vpack.c.bf16 %v703, %v702
        %s712 = scalar_lea.vmem %s1, 48
        %v713 = vld [vmem:[%s712] sm:$0xf]
        %v714 = vld [vmem:[%s712 + $0x4] sm:$0xf]
        %v715 = vld [vmem:[%s712 + $0x8] sm:$0xf]
        %v716 = vld [vmem:[%s712 + $0xc] sm:$0xf]
        %v721 = vunpack.c.l.b16 %v713
        %v722 = vunpack.c.l.b16 %v714
        %v723 = vunpack.c.l.b16 %v715
        %v724 = vunpack.c.l.b16 %v716
        %v725 = vpack.c.b16 %v722, %v721
        %v726 = vpack.c.b16 %v724, %v723
        %v730 = vsel %vm252, %v704, 0
        %v733 = vsel %vm252, %v705, 0
        %v736 = vsel %vm252, %v706, 0
        %v739 = vsel %vm252, %v707, 0
        %v742 = vsel %vm252, %v708, 0
        %v745 = vsel %vm252, %v709, 0
        %v748 = vsel %vm252, %v710, 0
        %v751 = vsel %vm252, %v711, 0
        %753 = vmatprep.subr.bf16.mxu0 0
        %754 = vmatpush1.bf16.msra.mxu0 %v725
        %755 = vmatprep.subr.bf16.mxu0 0
        %756 = vmatpush1.bf16.msra.mxu0 %v726
        %757 = vmatprep.subr.bf16.mxu0 0
        %758 = vmatpush1.bf16.msra.mxu0 0
        %759 = vmatprep.subr.bf16.mxu0 0
        %760 = vmatpush1.bf16.msra.mxu0 0
        %761 = vmatprep.subr.bf16.mxu0 0
        %762 = vmatpush1.bf16.msra.mxu0 0
        %763 = vmatprep.subr.bf16.mxu0 0
        %764 = vmatpush1.bf16.msra.mxu0 0
        %765 = vmatprep.subr.bf16.mxu0 0
        %766 = vmatpush1.bf16.msra.mxu0 0
        %767 = vmatprep.subr.bf16.mxu0 0
        %768 = vmatpush1.bf16.msra.mxu0 0
        %769 = vmatprep.subr.bf16.mxu0 0
        %770 = vmatpush1.bf16.msra.mxu0 0
        %771 = vmatprep.subr.bf16.mxu0 0
        %772 = vmatpush1.bf16.msra.mxu0 0
        %773 = vmatprep.subr.bf16.mxu0 0
        %774 = vmatpush1.bf16.msra.mxu0 0
        %775 = vmatprep.subr.bf16.mxu0 0
        %776 = vmatpush1.bf16.msra.mxu0 0
        %777 = vmatprep.subr.bf16.mxu0 0
        %778 = vmatpush1.bf16.msra.mxu0 0
        %779 = vmatprep.subr.bf16.mxu0 0
        %780 = vmatpush1.bf16.msra.mxu0 0
        %781 = vmatprep.subr.bf16.mxu0 0
        %782 = vmatpush1.bf16.msra.mxu0 0
        %783 = vmatprep.subr.bf16.mxu0 0
        %784 = vmatpush1.bf16.msra.mxu0 0
        %785 = vmatprep.mubr.bf16.mxu0 0
        %786 = vmatmul.mubr.bf16.gmra.mrb[0].mxu0 %v730
        %v787 = vpop.f32.mrb[0].mxu0
        %v788 = vadd.f32 0.0, %v787
        %v789 = vpop.f32.mrb[0].mxu0
        %v790 = vpop.f32.mrb[0].mxu0
        %v791 = vadd.f32 0.0, %v790
        %v792 = vpop.f32.mrb[0].mxu0
        %793 = vmatprep.mubr.bf16.mxu0 0
        %794 = vmatmul.mubr.bf16.gmra.mrb[0].mxu0 %v733
        %v795 = vpop.f32.mrb[0].mxu0
        %v796 = vadd.f32 0.0, %v795
        %v797 = vpop.f32.mrb[0].mxu0
        %v798 = vpop.f32.mrb[0].mxu0
        %v799 = vadd.f32 0.0, %v798
        %v800 = vpop.f32.mrb[0].mxu0
        %801 = vmatprep.mubr.bf16.mxu0 0
        %802 = vmatmul.mubr.bf16.gmra.mrb[0].mxu0 %v736
        %v803 = vpop.f32.mrb[0].mxu0
        %v804 = vadd.f32 0.0, %v803
        %v805 = vpop.f32.mrb[0].mxu0
        %v806 = vpop.f32.mrb[0].mxu0
        %v807 = vadd.f32 0.0, %v806
        %v808 = vpop.f32.mrb[0].mxu0
        %809 = vmatprep.mubr.bf16.mxu0 0
        %810 = vmatmul.mubr.bf16.gmra.mrb[0].mxu0 %v739
        %v811 = vpop.f32.mrb[0].mxu0
        %v812 = vadd.f32 0.0, %v811
        %v813 = vpop.f32.mrb[0].mxu0
        %v814 = vpop.f32.mrb[0].mxu0
        %v815 = vadd.f32 0.0, %v814
        %v816 = vpop.f32.mrb[0].mxu0
        %817 = vmatprep.mubr.bf16.mxu0 0
        %818 = vmatmul.mubr.bf16.gmra.mrb[0].mxu0 %v742
        %v819 = vpop.f32.mrb[0].mxu0
        %v820 = vadd.f32 0.0, %v819
        %v821 = vpop.f32.mrb[0].mxu0
        %v822 = vpop.f32.mrb[0].mxu0
        %v823 = vadd.f32 0.0, %v822
        %v824 = vpop.f32.mrb[0].mxu0
        %825 = vmatprep.mubr.bf16.mxu0 0
        %826 = vmatmul.mubr.bf16.gmra.mrb[0].mxu0 %v745
        %v827 = vpop.f32.mrb[0].mxu0
        %v828 = vadd.f32 0.0, %v827
        %v829 = vpop.f32.mrb[0].mxu0
        %v830 = vpop.f32.mrb[0].mxu0
        %v831 = vadd.f32 0.0, %v830
        %v832 = vpop.f32.mrb[0].mxu0
        %833 = vmatprep.mubr.bf16.mxu0 0
        %834 = vmatmul.mubr.bf16.gmra.mrb[0].mxu0 %v748
        %v835 = vpop.f32.mrb[0].mxu0
        %v836 = vadd.f32 0.0, %v835
        %v837 = vpop.f32.mrb[0].mxu0
        %v838 = vpop.f32.mrb[0].mxu0
        %v839 = vadd.f32 0.0, %v838
        %v840 = vpop.f32.mrb[0].mxu0
        %841 = vmatprep.mubr.bf16.mxu0 0
        %842 = vmatmul.mubr.bf16.gmra.mrb[0].mxu0 %v751
        %v843 = vpop.f32.mrb[0].mxu0
        %v844 = vadd.f32 0.0, %v843
        %v845 = vpop.f32.mrb[0].mxu0
        %v846 = vpop.f32.mrb[0].mxu0
        %v847 = vadd.f32 0.0, %v846
        %v848 = vpop.f32.mrb[0].mxu0
        %849 = vdwg.mxu0
        %v850 = vadd.f32 %v669, %v788
        %v851 = vadd.f32 %v670, %v791
        %v852 = vadd.f32 %v671, %v796
        %v853 = vadd.f32 %v672, %v799
        %v854 = vadd.f32 %v673, %v804
        %v855 = vadd.f32 %v674, %v807
        %v856 = vadd.f32 %v675, %v812
        %v857 = vadd.f32 %v676, %v815
        %v858 = vadd.f32 %v677, %v820
        %v859 = vadd.f32 %v678, %v823
        %v860 = vadd.f32 %v679, %v828
        %v861 = vadd.f32 %v680, %v831
        %v862 = vadd.f32 %v681, %v836
        %v863 = vadd.f32 %v682, %v839
        %v864 = vadd.f32 %v683, %v844
        %v865 = vadd.f32 %v684, %v847
        %v866 = vld [vmem:[%s687 + $0x1] sm:$0xff]
        %v867 = vld [vmem:[%s687 + $0x9] sm:$0xff]
        %v868 = vld [vmem:[%s687 + $0x19] sm:$0xff]
        %v869 = vld [vmem:[%s687 + $0x21] sm:$0xff]
        %v870 = vld [vmem:[%s687 + $0x31] sm:$0xff]
        %v871 = vld [vmem:[%s687 + $0x39] sm:$0xff]
        %v872 = vld [vmem:[%s687 + $0x49] sm:$0xff]
        %v873 = vld [vmem:[%s687 + $0x51] sm:$0xff]
        %v874 = vld [vmem:[%s687 + $0x61] sm:$0xff]
        %v875 = vld [vmem:[%s687 + $0x69] sm:$0xff]
        %v876 = vld [vmem:[%s687 + $0x79] sm:$0xff]
        %v877 = vld [vmem:[%s687 + $0x81] sm:$0xff]
        %v878 = vld [vmem:[%s687 + $0x91] sm:$0xff]
        %v879 = vld [vmem:[%s687 + $0x99] sm:$0xff]
        %v880 = vld [vmem:[%s687 + $0xa9] sm:$0xff]
        %v881 = vld [vmem:[%s687 + $0xb1] sm:$0xff]
        %v882 = vpack.c.bf16 %v867, %v866
        %v883 = vpack.c.bf16 %v869, %v868
        %v884 = vpack.c.bf16 %v871, %v870
        %v885 = vpack.c.bf16 %v873, %v872
        %v886 = vpack.c.bf16 %v875, %v874
        %v887 = vpack.c.bf16 %v877, %v876
        %v888 = vpack.c.bf16 %v879, %v878
        %v889 = vpack.c.bf16 %v881, %v880
        %s890 = scalar_lea.vmem %s1, 64
        %v891 = vld [vmem:[%s890] sm:$0xf]
        %v892 = vld [vmem:[%s890 + $0x4] sm:$0xf]
        %v893 = vld [vmem:[%s890 + $0x8] sm:$0xf]
        %v894 = vld [vmem:[%s890 + $0xc] sm:$0xf]
        %v899 = vunpack.c.l.b16 %v891
        %v900 = vunpack.c.l.b16 %v892
        %v901 = vunpack.c.l.b16 %v893
        %v902 = vunpack.c.l.b16 %v894
        %v903 = vpack.c.b16 %v900, %v899
        %v904 = vpack.c.b16 %v902, %v901
        %v908 = vsel %vm252, %v882, 0
        %v911 = vsel %vm252, %v883, 0
        %v914 = vsel %vm252, %v884, 0
        %v917 = vsel %vm252, %v885, 0
        %v920 = vsel %vm252, %v886, 0
        %v923 = vsel %vm252, %v887, 0
        %v926 = vsel %vm252, %v888, 0
        %v929 = vsel %vm252, %v889, 0
        %931 = vmatprep.subr.bf16.mxu0 0
        %932 = vmatpush1.bf16.msra.mxu0 %v903
        %933 = vmatprep.subr.bf16.mxu0 0
        %934 = vmatpush1.bf16.msra.mxu0 %v904
        %935 = vmatprep.subr.bf16.mxu0 0
        %936 = vmatpush1.bf16.msra.mxu0 0
        %937 = vmatprep.subr.bf16.mxu0 0
        %938 = vmatpush1.bf16.msra.mxu0 0
        %939 = vmatprep.subr.bf16.mxu0 0
        %940 = vmatpush1.bf16.msra.mxu0 0
        %941 = vmatprep.subr.bf16.mxu0 0
        %942 = vmatpush1.bf16.msra.mxu0 0
        %943 = vmatprep.subr.bf16.mxu0 0
        %944 = vmatpush1.bf16.msra.mxu0 0
        %945 = vmatprep.subr.bf16.mxu0 0
        %946 = vmatpush1.bf16.msra.mxu0 0
        %947 = vmatprep.subr.bf16.mxu0 0
        %948 = vmatpush1.bf16.msra.mxu0 0
        %949 = vmatprep.subr.bf16.mxu0 0
        %950 = vmatpush1.bf16.msra.mxu0 0
        %951 = vmatprep.subr.bf16.mxu0 0
        %952 = vmatpush1.bf16.msra.mxu0 0
        %953 = vmatprep.subr.bf16.mxu0 0
        %954 = vmatpush1.bf16.msra.mxu0 0
        %955 = vmatprep.subr.bf16.mxu0 0
        %956 = vmatpush1.bf16.msra.mxu0 0
        %957 = vmatprep.subr.bf16.mxu0 0
        %958 = vmatpush1.bf16.msra.mxu0 0
        %959 = vmatprep.subr.bf16.mxu0 0
        %960 = vmatpush1.bf16.msra.mxu0 0
        %961 = vmatprep.subr.bf16.mxu0 0
        %962 = vmatpush1.bf16.msra.mxu0 0
        %963 = vmatprep.mubr.bf16.mxu0 0
        %964 = vmatmul.mubr.bf16.gmra.mrb[0].mxu0 %v908
        %v965 = vpop.f32.mrb[0].mxu0
        %v966 = vadd.f32 0.0, %v965
        %v967 = vpop.f32.mrb[0].mxu0
        %v968 = vpop.f32.mrb[0].mxu0
        %v969 = vadd.f32 0.0, %v968
        %v970 = vpop.f32.mrb[0].mxu0
        %971 = vmatprep.mubr.bf16.mxu0 0
        %972 = vmatmul.mubr.bf16.gmra.mrb[0].mxu0 %v911
        %v973 = vpop.f32.mrb[0].mxu0
        %v974 = vadd.f32 0.0, %v973
        %v975 = vpop.f32.mrb[0].mxu0
        %v976 = vpop.f32.mrb[0].mxu0
        %v977 = vadd.f32 0.0, %v976
        %v978 = vpop.f32.mrb[0].mxu0
        %979 = vmatprep.mubr.bf16.mxu0 0
        %980 = vmatmul.mubr.bf16.gmra.mrb[0].mxu0 %v914
        %v981 = vpop.f32.mrb[0].mxu0
        %v982 = vadd.f32 0.0, %v981
        %v983 = vpop.f32.mrb[0].mxu0
        %v984 = vpop.f32.mrb[0].mxu0
        %v985 = vadd.f32 0.0, %v984
        %v986 = vpop.f32.mrb[0].mxu0
        %987 = vmatprep.mubr.bf16.mxu0 0
        %988 = vmatmul.mubr.bf16.gmra.mrb[0].mxu0 %v917
        %v989 = vpop.f32.mrb[0].mxu0
        %v990 = vadd.f32 0.0, %v989
        %v991 = vpop.f32.mrb[0].mxu0
        %v992 = vpop.f32.mrb[0].mxu0
        %v993 = vadd.f32 0.0, %v992
        %v994 = vpop.f32.mrb[0].mxu0
        %995 = vmatprep.mubr.bf16.mxu0 0
        %996 = vmatmul.mubr.bf16.gmra.mrb[0].mxu0 %v920
        %v997 = vpop.f32.mrb[0].mxu0
        %v998 = vadd.f32 0.0, %v997
        %v999 = vpop.f32.mrb[0].mxu0
        %v1000 = vpop.f32.mrb[0].mxu0
        %v1001 = vadd.f32 0.0, %v1000
        %v1002 = vpop.f32.mrb[0].mxu0
        %1003 = vmatprep.mubr.bf16.mxu0 0
        %1004 = vmatmul.mubr.bf16.gmra.mrb[0].mxu0 %v923
        %v1005 = vpop.f32.mrb[0].mxu0
        %v1006 = vadd.f32 0.0, %v1005
        %v1007 = vpop.f32.mrb[0].mxu0
        %v1008 = vpop.f32.mrb[0].mxu0
        %v1009 = vadd.f32 0.0, %v1008
        %v1010 = vpop.f32.mrb[0].mxu0
        %1011 = vmatprep.mubr.bf16.mxu0 0
        %1012 = vmatmul.mubr.bf16.gmra.mrb[0].mxu0 %v926
        %v1013 = vpop.f32.mrb[0].mxu0
        %v1014 = vadd.f32 0.0, %v1013
        %v1015 = vpop.f32.mrb[0].mxu0
        %v1016 = vpop.f32.mrb[0].mxu0
        %v1017 = vadd.f32 0.0, %v1016
        %v1018 = vpop.f32.mrb[0].mxu0
        %1019 = vmatprep.mubr.bf16.mxu0 0
        %1020 = vmatmul.mubr.bf16.gmra.mrb[0].mxu0 %v929
        %v1021 = vpop.f32.mrb[0].mxu0
        %v1022 = vadd.f32 0.0, %v1021
        %v1023 = vpop.f32.mrb[0].mxu0
        %v1024 = vpop.f32.mrb[0].mxu0
        %v1025 = vadd.f32 0.0, %v1024
        %v1026 = vpop.f32.mrb[0].mxu0
        %1027 = vdwg.mxu0
        %v1028 = vadd.f32 %v850, %v966
        %v1029 = vadd.f32 %v851, %v969
        %v1030 = vadd.f32 %v852, %v974
        %v1031 = vadd.f32 %v853, %v977
        %v1032 = vadd.f32 %v854, %v982
        %v1033 = vadd.f32 %v855, %v985
        %v1034 = vadd.f32 %v856, %v990
        %v1035 = vadd.f32 %v857, %v993
        %v1036 = vadd.f32 %v858, %v998
        %v1037 = vadd.f32 %v859, %v1001
        %v1038 = vadd.f32 %v860, %v1006
        %v1039 = vadd.f32 %v861, %v1009
        %v1040 = vadd.f32 %v862, %v1014
        %v1041 = vadd.f32 %v863, %v1017
        %v1042 = vadd.f32 %v864, %v1022
        %v1043 = vadd.f32 %v865, %v1025
        %v1044 = vld [vmem:[%s687 + $0x2] sm:$0xff]
        %v1045 = vld [vmem:[%s687 + $0xa] sm:$0xff]
        %v1046 = vld [vmem:[%s687 + $0x1a] sm:$0xff]
        %v1047 = vld [vmem:[%s687 + $0x22] sm:$0xff]
        %v1048 = vld [vmem:[%s687 + $0x32] sm:$0xff]
        %v1049 = vld [vmem:[%s687 + $0x3a] sm:$0xff]
        %v1050 = vld [vmem:[%s687 + $0x4a] sm:$0xff]
        %v1051 = vld [vmem:[%s687 + $0x52] sm:$0xff]
        %v1052 = vld [vmem:[%s687 + $0x62] sm:$0xff]
        %v1053 = vld [vmem:[%s687 + $0x6a] sm:$0xff]
        %v1054 = vld [vmem:[%s687 + $0x7a] sm:$0xff]
        %v1055 = vld [vmem:[%s687 + $0x82] sm:$0xff]
        %v1056 = vld [vmem:[%s687 + $0x92] sm:$0xff]
        %v1057 = vld [vmem:[%s687 + $0x9a] sm:$0xff]
        %v1058 = vld [vmem:[%s687 + $0xaa] sm:$0xff]
        %v1059 = vld [vmem:[%s687 + $0xb2] sm:$0xff]
        %v1060 = vpack.c.bf16 %v1045, %v1044
        %v1061 = vpack.c.bf16 %v1047, %v1046
        %v1062 = vpack.c.bf16 %v1049, %v1048
        %v1063 = vpack.c.bf16 %v1051, %v1050
        %v1064 = vpack.c.bf16 %v1053, %v1052
        %v1065 = vpack.c.bf16 %v1055, %v1054
        %v1066 = vpack.c.bf16 %v1057, %v1056
        %v1067 = vpack.c.bf16 %v1059, %v1058
        %s1068 = scalar_lea.vmem %s1, 80
        %v1069 = vld [vmem:[%s1068] sm:$0xf]
        %v1070 = vld [vmem:[%s1068 + $0x4] sm:$0xf]
        %v1071 = vld [vmem:[%s1068 + $0x8] sm:$0xf]
        %v1072 = vld [vmem:[%s1068 + $0xc] sm:$0xf]
        %v1077 = vunpack.c.l.b16 %v1069
        %v1078 = vunpack.c.l.b16 %v1070
        %v1079 = vunpack.c.l.b16 %v1071
        %v1080 = vunpack.c.l.b16 %v1072
        %v1081 = vpack.c.b16 %v1078, %v1077
        %v1082 = vpack.c.b16 %v1080, %v1079
        %v1086 = vsel %vm252, %v1060, 0
        %v1089 = vsel %vm252, %v1061, 0
        %v1092 = vsel %vm252, %v1062, 0
        %v1095 = vsel %vm252, %v1063, 0
        %v1098 = vsel %vm252, %v1064, 0
        %v1101 = vsel %vm252, %v1065, 0
        %v1104 = vsel %vm252, %v1066, 0
        %v1107 = vsel %vm252, %v1067, 0
        %1109 = vmatprep.subr.bf16.mxu0 0
        %1110 = vmatpush1.bf16.msra.mxu0 %v1081
        %1111 = vmatprep.subr.bf16.mxu0 0
        %1112 = vmatpush1.bf16.msra.mxu0 %v1082
        %1113 = vmatprep.subr.bf16.mxu0 0
        %1114 = vmatpush1.bf16.msra.mxu0 0
        %1115 = vmatprep.subr.bf16.mxu0 0
        %1116 = vmatpush1.bf16.msra.mxu0 0
        %1117 = vmatprep.subr.bf16.mxu0 0
        %1118 = vmatpush1.bf16.msra.mxu0 0
        %1119 = vmatprep.subr.bf16.mxu0 0
        %1120 = vmatpush1.bf16.msra.mxu0 0
        %1121 = vmatprep.subr.bf16.mxu0 0
        %1122 = vmatpush1.bf16.msra.mxu0 0
        %1123 = vmatprep.subr.bf16.mxu0 0
        %1124 = vmatpush1.bf16.msra.mxu0 0
        %1125 = vmatprep.subr.bf16.mxu0 0
        %1126 = vmatpush1.bf16.msra.mxu0 0
        %1127 = vmatprep.subr.bf16.mxu0 0
        %1128 = vmatpush1.bf16.msra.mxu0 0
        %1129 = vmatprep.subr.bf16.mxu0 0
        %1130 = vmatpush1.bf16.msra.mxu0 0
        %1131 = vmatprep.subr.bf16.mxu0 0
        %1132 = vmatpush1.bf16.msra.mxu0 0
        %1133 = vmatprep.subr.bf16.mxu0 0
        %1134 = vmatpush1.bf16.msra.mxu0 0
        %1135 = vmatprep.subr.bf16.mxu0 0
        %1136 = vmatpush1.bf16.msra.mxu0 0
        %1137 = vmatprep.subr.bf16.mxu0 0
        %1138 = vmatpush1.bf16.msra.mxu0 0
        %1139 = vmatprep.subr.bf16.mxu0 0
        %1140 = vmatpush1.bf16.msra.mxu0 0
        %1141 = vmatprep.mubr.bf16.mxu0 0
        %1142 = vmatmul.mubr.bf16.gmra.mrb[0].mxu0 %v1086
        %v1143 = vpop.f32.mrb[0].mxu0
        %v1144 = vadd.f32 0.0, %v1143
        %v1145 = vpop.f32.mrb[0].mxu0
        %v1146 = vpop.f32.mrb[0].mxu0
        %v1147 = vadd.f32 0.0, %v1146
        %v1148 = vpop.f32.mrb[0].mxu0
        %1149 = vmatprep.mubr.bf16.mxu0 0
        %1150 = vmatmul.mubr.bf16.gmra.mrb[0].mxu0 %v1089
        %v1151 = vpop.f32.mrb[0].mxu0
        %v1152 = vadd.f32 0.0, %v1151
        %v1153 = vpop.f32.mrb[0].mxu0
        %v1154 = vpop.f32.mrb[0].mxu0
        %v1155 = vadd.f32 0.0, %v1154
        %v1156 = vpop.f32.mrb[0].mxu0
        %1157 = vmatprep.mubr.bf16.mxu0 0
        %1158 = vmatmul.mubr.bf16.gmra.mrb[0].mxu0 %v1092
        %v1159 = vpop.f32.mrb[0].mxu0
        %v1160 = vadd.f32 0.0, %v1159
        %v1161 = vpop.f32.mrb[0].mxu0
        %v1162 = vpop.f32.mrb[0].mxu0
        %v1163 = vadd.f32 0.0, %v1162
        %v1164 = vpop.f32.mrb[0].mxu0
        %1165 = vmatprep.mubr.bf16.mxu0 0
        %1166 = vmatmul.mubr.bf16.gmra.mrb[0].mxu0 %v1095
        %v1167 = vpop.f32.mrb[0].mxu0
        %v1168 = vadd.f32 0.0, %v1167
        %v1169 = vpop.f32.mrb[0].mxu0
        %v1170 = vpop.f32.mrb[0].mxu0
        %v1171 = vadd.f32 0.0, %v1170
        %v1172 = vpop.f32.mrb[0].mxu0
        %1173 = vmatprep.mubr.bf16.mxu0 0
        %1174 = vmatmul.mubr.bf16.gmra.mrb[0].mxu0 %v1098
        %v1175 = vpop.f32.mrb[0].mxu0
        %v1176 = vadd.f32 0.0, %v1175
        %v1177 = vpop.f32.mrb[0].mxu0
        %v1178 = vpop.f32.mrb[0].mxu0
        %v1179 = vadd.f32 0.0, %v1178
        %v1180 = vpop.f32.mrb[0].mxu0
        %1181 = vmatprep.mubr.bf16.mxu0 0
        %1182 = vmatmul.mubr.bf16.gmra.mrb[0].mxu0 %v1101
        %v1183 = vpop.f32.mrb[0].mxu0
        %v1184 = vadd.f32 0.0, %v1183
        %v1185 = vpop.f32.mrb[0].mxu0
        %v1186 = vpop.f32.mrb[0].mxu0
        %v1187 = vadd.f32 0.0, %v1186
        %v1188 = vpop.f32.mrb[0].mxu0
        %1189 = vmatprep.mubr.bf16.mxu0 0
        %1190 = vmatmul.mubr.bf16.gmra.mrb[0].mxu0 %v1104
        %v1191 = vpop.f32.mrb[0].mxu0
        %v1192 = vadd.f32 0.0, %v1191
        %v1193 = vpop.f32.mrb[0].mxu0
        %v1194 = vpop.f32.mrb[0].mxu0
        %v1195 = vadd.f32 0.0, %v1194
        %v1196 = vpop.f32.mrb[0].mxu0
        %1197 = vmatprep.mubr.bf16.mxu0 0
        %1198 = vmatmul.mubr.bf16.gmra.mrb[0].mxu0 %v1107
        %v1199 = vpop.f32.mrb[0].mxu0
        %v1200 = vadd.f32 0.0, %v1199
        %v1201 = vpop.f32.mrb[0].mxu0
        %v1202 = vpop.f32.mrb[0].mxu0
        %v1203 = vadd.f32 0.0, %v1202
        %v1204 = vpop.f32.mrb[0].mxu0
        %1205 = vdwg.mxu0
        %v1206 = vadd.f32 %v1028, %v1144
        %v1207 = vadd.f32 %v1029, %v1147
        %v1208 = vadd.f32 %v1030, %v1152
        %v1209 = vadd.f32 %v1031, %v1155
        %v1210 = vadd.f32 %v1032, %v1160
        %v1211 = vadd.f32 %v1033, %v1163
        %v1212 = vadd.f32 %v1034, %v1168
        %v1213 = vadd.f32 %v1035, %v1171
        %v1214 = vadd.f32 %v1036, %v1176
        %v1215 = vadd.f32 %v1037, %v1179
        %v1216 = vadd.f32 %v1038, %v1184
        %v1217 = vadd.f32 %v1039, %v1187
        %v1218 = vadd.f32 %v1040, %v1192
        %v1219 = vadd.f32 %v1041, %v1195
        %v1220 = vadd.f32 %v1042, %v1200
        %v1221 = vadd.f32 %v1043, %v1203
        %s1222 = sadd.s32 %s180, 2
        %s1223 = smul.u32 %s1222, 24
        %s1224 = scalar_lea.vmem %s178, %s1223
        %v1225 = vld [vmem:[%s1224] sm:$0xff]
        %v1226 = vld [vmem:[%s1224 + $0x8] sm:$0xff]
        %v1227 = vld [vmem:[%s1224 + $0x18] sm:$0xff]
        %v1228 = vld [vmem:[%s1224 + $0x20] sm:$0xff]
        %v1229 = vld [vmem:[%s1224 + $0x30] sm:$0xff]
        %v1230 = vld [vmem:[%s1224 + $0x38] sm:$0xff]
        %v1231 = vld [vmem:[%s1224 + $0x48] sm:$0xff]
        %v1232 = vld [vmem:[%s1224 + $0x50] sm:$0xff]
        %v1233 = vld [vmem:[%s1224 + $0x60] sm:$0xff]
        %v1234 = vld [vmem:[%s1224 + $0x68] sm:$0xff]
        %v1235 = vld [vmem:[%s1224 + $0x78] sm:$0xff]
        %v1236 = vld [vmem:[%s1224 + $0x80] sm:$0xff]
        %v1237 = vld [vmem:[%s1224 + $0x90] sm:$0xff]
        %v1238 = vld [vmem:[%s1224 + $0x98] sm:$0xff]
        %v1239 = vld [vmem:[%s1224 + $0xa8] sm:$0xff]
        %v1240 = vld [vmem:[%s1224 + $0xb0] sm:$0xff]
        %v1241 = vpack.c.bf16 %v1226, %v1225
        %v1242 = vpack.c.bf16 %v1228, %v1227
        %v1243 = vpack.c.bf16 %v1230, %v1229
        %v1244 = vpack.c.bf16 %v1232, %v1231
        %v1245 = vpack.c.bf16 %v1234, %v1233
        %v1246 = vpack.c.bf16 %v1236, %v1235
        %v1247 = vpack.c.bf16 %v1238, %v1237
        %v1248 = vpack.c.bf16 %v1240, %v1239
        %s1249 = scalar_lea.vmem %s1, 96
        %v1250 = vld [vmem:[%s1249] sm:$0xf]
        %v1251 = vld [vmem:[%s1249 + $0x4] sm:$0xf]
        %v1252 = vld [vmem:[%s1249 + $0x8] sm:$0xf]
        %v1253 = vld [vmem:[%s1249 + $0xc] sm:$0xf]
        %v1258 = vunpack.c.l.b16 %v1250
        %v1259 = vunpack.c.l.b16 %v1251
        %v1260 = vunpack.c.l.b16 %v1252
        %v1261 = vunpack.c.l.b16 %v1253
        %v1262 = vpack.c.b16 %v1259, %v1258
        %v1263 = vpack.c.b16 %v1261, %v1260
        %v1267 = vsel %vm252, %v1241, 0
        %v1270 = vsel %vm252, %v1242, 0
        %v1273 = vsel %vm252, %v1243, 0
        %v1276 = vsel %vm252, %v1244, 0
        %v1279 = vsel %vm252, %v1245, 0
        %v1282 = vsel %vm252, %v1246, 0
        %v1285 = vsel %vm252, %v1247, 0
        %v1288 = vsel %vm252, %v1248, 0
        %1290 = vmatprep.subr.bf16.mxu0 0
        %1291 = vmatpush1.bf16.msra.mxu0 %v1262
        %1292 = vmatprep.subr.bf16.mxu0 0
        %1293 = vmatpush1.bf16.msra.mxu0 %v1263
        %1294 = vmatprep.subr.bf16.mxu0 0
        %1295 = vmatpush1.bf16.msra.mxu0 0
        %1296 = vmatprep.subr.bf16.mxu0 0
        %1297 = vmatpush1.bf16.msra.mxu0 0
        %1298 = vmatprep.subr.bf16.mxu0 0
        %1299 = vmatpush1.bf16.msra.mxu0 0
        %1300 = vmatprep.subr.bf16.mxu0 0
        %1301 = vmatpush1.bf16.msra.mxu0 0
        %1302 = vmatprep.subr.bf16.mxu0 0
        %1303 = vmatpush1.bf16.msra.mxu0 0
        %1304 = vmatprep.subr.bf16.mxu0 0
        %1305 = vmatpush1.bf16.msra.mxu0 0
        %1306 = vmatprep.subr.bf16.mxu0 0
        %1307 = vmatpush1.bf16.msra.mxu0 0
        %1308 = vmatprep.subr.bf16.mxu0 0
        %1309 = vmatpush1.bf16.msra.mxu0 0
        %1310 = vmatprep.subr.bf16.mxu0 0
        %1311 = vmatpush1.bf16.msra.mxu0 0
        %1312 = vmatprep.subr.bf16.mxu0 0
        %1313 = vmatpush1.bf16.msra.mxu0 0
        %1314 = vmatprep.subr.bf16.mxu0 0
        %1315 = vmatpush1.bf16.msra.mxu0 0
        %1316 = vmatprep.subr.bf16.mxu0 0
        %1317 = vmatpush1.bf16.msra.mxu0 0
        %1318 = vmatprep.subr.bf16.mxu0 0
        %1319 = vmatpush1.bf16.msra.mxu0 0
        %1320 = vmatprep.subr.bf16.mxu0 0
        %1321 = vmatpush1.bf16.msra.mxu0 0
        %1322 = vmatprep.mubr.bf16.mxu0 0
        %1323 = vmatmul.mubr.bf16.gmra.mrb[0].mxu0 %v1267
        %v1324 = vpop.f32.mrb[0].mxu0
        %v1325 = vadd.f32 0.0, %v1324
        %v1326 = vpop.f32.mrb[0].mxu0
        %v1327 = vpop.f32.mrb[0].mxu0
        %v1328 = vadd.f32 0.0, %v1327
        %v1329 = vpop.f32.mrb[0].mxu0
        %1330 = vmatprep.mubr.bf16.mxu0 0
        %1331 = vmatmul.mubr.bf16.gmra.mrb[0].mxu0 %v1270
        %v1332 = vpop.f32.mrb[0].mxu0
        %v1333 = vadd.f32 0.0, %v1332
        %v1334 = vpop.f32.mrb[0].mxu0
        %v1335 = vpop.f32.mrb[0].mxu0
        %v1336 = vadd.f32 0.0, %v1335
        %v1337 = vpop.f32.mrb[0].mxu0
        %1338 = vmatprep.mubr.bf16.mxu0 0
        %1339 = vmatmul.mubr.bf16.gmra.mrb[0].mxu0 %v1273
        %v1340 = vpop.f32.mrb[0].mxu0
        %v1341 = vadd.f32 0.0, %v1340
        %v1342 = vpop.f32.mrb[0].mxu0
        %v1343 = vpop.f32.mrb[0].mxu0
        %v1344 = vadd.f32 0.0, %v1343
        %v1345 = vpop.f32.mrb[0].mxu0
        %1346 = vmatprep.mubr.bf16.mxu0 0
        %1347 = vmatmul.mubr.bf16.gmra.mrb[0].mxu0 %v1276
        %v1348 = vpop.f32.mrb[0].mxu0
        %v1349 = vadd.f32 0.0, %v1348
        %v1350 = vpop.f32.mrb[0].mxu0
        %v1351 = vpop.f32.mrb[0].mxu0
        %v1352 = vadd.f32 0.0, %v1351
        %v1353 = vpop.f32.mrb[0].mxu0
        %1354 = vmatprep.mubr.bf16.mxu0 0
        %1355 = vmatmul.mubr.bf16.gmra.mrb[0].mxu0 %v1279
        %v1356 = vpop.f32.mrb[0].mxu0
        %v1357 = vadd.f32 0.0, %v1356
        %v1358 = vpop.f32.mrb[0].mxu0
        %v1359 = vpop.f32.mrb[0].mxu0
        %v1360 = vadd.f32 0.0, %v1359
        %v1361 = vpop.f32.mrb[0].mxu0
        %1362 = vmatprep.mubr.bf16.mxu0 0
        %1363 = vmatmul.mubr.bf16.gmra.mrb[0].mxu0 %v1282
        %v1364 = vpop.f32.mrb[0].mxu0
        %v1365 = vadd.f32 0.0, %v1364
        %v1366 = vpop.f32.mrb[0].mxu0
        %v1367 = vpop.f32.mrb[0].mxu0
        %v1368 = vadd.f32 0.0, %v1367
        %v1369 = vpop.f32.mrb[0].mxu0
        %1370 = vmatprep.mubr.bf16.mxu0 0
        %1371 = vmatmul.mubr.bf16.gmra.mrb[0].mxu0 %v1285
        %v1372 = vpop.f32.mrb[0].mxu0
        %v1373 = vadd.f32 0.0, %v1372
        %v1374 = vpop.f32.mrb[0].mxu0
        %v1375 = vpop.f32.mrb[0].mxu0
        %v1376 = vadd.f32 0.0, %v1375
        %v1377 = vpop.f32.mrb[0].mxu0
        %1378 = vmatprep.mubr.bf16.mxu0 0
        %1379 = vmatmul.mubr.bf16.gmra.mrb[0].mxu0 %v1288
        %v1380 = vpop.f32.mrb[0].mxu0
        %v1381 = vadd.f32 0.0, %v1380
        %v1382 = vpop.f32.mrb[0].mxu0
        %v1383 = vpop.f32.mrb[0].mxu0
        %v1384 = vadd.f32 0.0, %v1383
        %v1385 = vpop.f32.mrb[0].mxu0
        %1386 = vdwg.mxu0
        %v1387 = vadd.f32 %v1206, %v1325
        %v1388 = vadd.f32 %v1207, %v1328
        %v1389 = vadd.f32 %v1208, %v1333
        %v1390 = vadd.f32 %v1209, %v1336
        %v1391 = vadd.f32 %v1210, %v1341
        %v1392 = vadd.f32 %v1211, %v1344
        %v1393 = vadd.f32 %v1212, %v1349
        %v1394 = vadd.f32 %v1213, %v1352
        %v1395 = vadd.f32 %v1214, %v1357
        %v1396 = vadd.f32 %v1215, %v1360
        %v1397 = vadd.f32 %v1216, %v1365
        %v1398 = vadd.f32 %v1217, %v1368
        %v1399 = vadd.f32 %v1218, %v1373
        %v1400 = vadd.f32 %v1219, %v1376
        %v1401 = vadd.f32 %v1220, %v1381
        %v1402 = vadd.f32 %v1221, %v1384
        %v1403 = vld [vmem:[%s1224 + $0x1] sm:$0xff]
        %v1404 = vld [vmem:[%s1224 + $0x9] sm:$0xff]
        %v1405 = vld [vmem:[%s1224 + $0x19] sm:$0xff]
        %v1406 = vld [vmem:[%s1224 + $0x21] sm:$0xff]
        %v1407 = vld [vmem:[%s1224 + $0x31] sm:$0xff]
        %v1408 = vld [vmem:[%s1224 + $0x39] sm:$0xff]
        %v1409 = vld [vmem:[%s1224 + $0x49] sm:$0xff]
        %v1410 = vld [vmem:[%s1224 + $0x51] sm:$0xff]
        %v1411 = vld [vmem:[%s1224 + $0x61] sm:$0xff]
        %v1412 = vld [vmem:[%s1224 + $0x69] sm:$0xff]
        %v1413 = vld [vmem:[%s1224 + $0x79] sm:$0xff]
        %v1414 = vld [vmem:[%s1224 + $0x81] sm:$0xff]
        %v1415 = vld [vmem:[%s1224 + $0x91] sm:$0xff]
        %v1416 = vld [vmem:[%s1224 + $0x99] sm:$0xff]
        %v1417 = vld [vmem:[%s1224 + $0xa9] sm:$0xff]
        %v1418 = vld [vmem:[%s1224 + $0xb1] sm:$0xff]
        %v1419 = vpack.c.bf16 %v1404, %v1403
        %v1420 = vpack.c.bf16 %v1406, %v1405
        %v1421 = vpack.c.bf16 %v1408, %v1407
        %v1422 = vpack.c.bf16 %v1410, %v1409
        %v1423 = vpack.c.bf16 %v1412, %v1411
        %v1424 = vpack.c.bf16 %v1414, %v1413
        %v1425 = vpack.c.bf16 %v1416, %v1415
        %v1426 = vpack.c.bf16 %v1418, %v1417
        %s1427 = scalar_lea.vmem %s1, 112
        %v1428 = vld [vmem:[%s1427] sm:$0xf]
        %v1429 = vld [vmem:[%s1427 + $0x4] sm:$0xf]
        %v1430 = vld [vmem:[%s1427 + $0x8] sm:$0xf]
        %v1431 = vld [vmem:[%s1427 + $0xc] sm:$0xf]
        %v1436 = vunpack.c.l.b16 %v1428
        %v1437 = vunpack.c.l.b16 %v1429
        %v1438 = vunpack.c.l.b16 %v1430
        %v1439 = vunpack.c.l.b16 %v1431
        %v1440 = vpack.c.b16 %v1437, %v1436
        %v1441 = vpack.c.b16 %v1439, %v1438
        %v1445 = vsel %vm252, %v1419, 0
        %v1448 = vsel %vm252, %v1420, 0
        %v1451 = vsel %vm252, %v1421, 0
        %v1454 = vsel %vm252, %v1422, 0
        %v1457 = vsel %vm252, %v1423, 0
        %v1460 = vsel %vm252, %v1424, 0
        %v1463 = vsel %vm252, %v1425, 0
        %v1466 = vsel %vm252, %v1426, 0
        %1468 = vmatprep.subr.bf16.mxu0 0
        %1469 = vmatpush1.bf16.msra.mxu0 %v1440
        %1470 = vmatprep.subr.bf16.mxu0 0
        %1471 = vmatpush1.bf16.msra.mxu0 %v1441
        %1472 = vmatprep.subr.bf16.mxu0 0
        %1473 = vmatpush1.bf16.msra.mxu0 0
        %1474 = vmatprep.subr.bf16.mxu0 0
        %1475 = vmatpush1.bf16.msra.mxu0 0
        %1476 = vmatprep.subr.bf16.mxu0 0
        %1477 = vmatpush1.bf16.msra.mxu0 0
        %1478 = vmatprep.subr.bf16.mxu0 0
        %1479 = vmatpush1.bf16.msra.mxu0 0
        %1480 = vmatprep.subr.bf16.mxu0 0
        %1481 = vmatpush1.bf16.msra.mxu0 0
        %1482 = vmatprep.subr.bf16.mxu0 0
        %1483 = vmatpush1.bf16.msra.mxu0 0
        %1484 = vmatprep.subr.bf16.mxu0 0
        %1485 = vmatpush1.bf16.msra.mxu0 0
        %1486 = vmatprep.subr.bf16.mxu0 0
        %1487 = vmatpush1.bf16.msra.mxu0 0
        %1488 = vmatprep.subr.bf16.mxu0 0
        %1489 = vmatpush1.bf16.msra.mxu0 0
        %1490 = vmatprep.subr.bf16.mxu0 0
        %1491 = vmatpush1.bf16.msra.mxu0 0
        %1492 = vmatprep.subr.bf16.mxu0 0
        %1493 = vmatpush1.bf16.msra.mxu0 0
        %1494 = vmatprep.subr.bf16.mxu0 0
        %1495 = vmatpush1.bf16.msra.mxu0 0
        %1496 = vmatprep.subr.bf16.mxu0 0
        %1497 = vmatpush1.bf16.msra.mxu0 0
        %1498 = vmatprep.subr.bf16.mxu0 0
        %1499 = vmatpush1.bf16.msra.mxu0 0
        %1500 = vmatprep.mubr.bf16.mxu0 0
        %1501 = vmatmul.mubr.bf16.gmra.mrb[0].mxu0 %v1445
        %v1502 = vpop.f32.mrb[0].mxu0
        %v1503 = vadd.f32 0.0, %v1502
        %v1504 = vpop.f32.mrb[0].mxu0
        %v1505 = vpop.f32.mrb[0].mxu0
        %v1506 = vadd.f32 0.0, %v1505
        %v1507 = vpop.f32.mrb[0].mxu0
        %1508 = vmatprep.mubr.bf16.mxu0 0
        %1509 = vmatmul.mubr.bf16.gmra.mrb[0].mxu0 %v1448
        %v1510 = vpop.f32.mrb[0].mxu0
        %v1511 = vadd.f32 0.0, %v1510
        %v1512 = vpop.f32.mrb[0].mxu0
        %v1513 = vpop.f32.mrb[0].mxu0
        %v1514 = vadd.f32 0.0, %v1513
        %v1515 = vpop.f32.mrb[0].mxu0
        %1516 = vmatprep.mubr.bf16.mxu0 0
        %1517 = vmatmul.mubr.bf16.gmra.mrb[0].mxu0 %v1451
        %v1518 = vpop.f32.mrb[0].mxu0
        %v1519 = vadd.f32 0.0, %v1518
        %v1520 = vpop.f32.mrb[0].mxu0
        %v1521 = vpop.f32.mrb[0].mxu0
        %v1522 = vadd.f32 0.0, %v1521
        %v1523 = vpop.f32.mrb[0].mxu0
        %1524 = vmatprep.mubr.bf16.mxu0 0
        %1525 = vmatmul.mubr.bf16.gmra.mrb[0].mxu0 %v1454
        %v1526 = vpop.f32.mrb[0].mxu0
        %v1527 = vadd.f32 0.0, %v1526
        %v1528 = vpop.f32.mrb[0].mxu0
        %v1529 = vpop.f32.mrb[0].mxu0
        %v1530 = vadd.f32 0.0, %v1529
        %v1531 = vpop.f32.mrb[0].mxu0
        %1532 = vmatprep.mubr.bf16.mxu0 0
        %1533 = vmatmul.mubr.bf16.gmra.mrb[0].mxu0 %v1457
        %v1534 = vpop.f32.mrb[0].mxu0
        %v1535 = vadd.f32 0.0, %v1534
        %v1536 = vpop.f32.mrb[0].mxu0
        %v1537 = vpop.f32.mrb[0].mxu0
        %v1538 = vadd.f32 0.0, %v1537
        %v1539 = vpop.f32.mrb[0].mxu0
        %1540 = vmatprep.mubr.bf16.mxu0 0
        %1541 = vmatmul.mubr.bf16.gmra.mrb[0].mxu0 %v1460
        %v1542 = vpop.f32.mrb[0].mxu0
        %v1543 = vadd.f32 0.0, %v1542
        %v1544 = vpop.f32.mrb[0].mxu0
        %v1545 = vpop.f32.mrb[0].mxu0
        %v1546 = vadd.f32 0.0, %v1545
        %v1547 = vpop.f32.mrb[0].mxu0
        %1548 = vmatprep.mubr.bf16.mxu0 0
        %1549 = vmatmul.mubr.bf16.gmra.mrb[0].mxu0 %v1463
        %v1550 = vpop.f32.mrb[0].mxu0
        %v1551 = vadd.f32 0.0, %v1550
        %v1552 = vpop.f32.mrb[0].mxu0
        %v1553 = vpop.f32.mrb[0].mxu0
        %v1554 = vadd.f32 0.0, %v1553
        %v1555 = vpop.f32.mrb[0].mxu0
        %1556 = vmatprep.mubr.bf16.mxu0 0
        %1557 = vmatmul.mubr.bf16.gmra.mrb[0].mxu0 %v1466
        %v1558 = vpop.f32.mrb[0].mxu0
        %v1559 = vadd.f32 0.0, %v1558
        %v1560 = vpop.f32.mrb[0].mxu0
        %v1561 = vpop.f32.mrb[0].mxu0
        %v1562 = vadd.f32 0.0, %v1561
        %v1563 = vpop.f32.mrb[0].mxu0
        %1564 = vdwg.mxu0
        %v1565 = vadd.f32 %v1387, %v1503
        %v1566 = vadd.f32 %v1388, %v1506
        %v1567 = vadd.f32 %v1389, %v1511
        %v1568 = vadd.f32 %v1390, %v1514
        %v1569 = vadd.f32 %v1391, %v1519
        %v1570 = vadd.f32 %v1392, %v1522
        %v1571 = vadd.f32 %v1393, %v1527
        %v1572 = vadd.f32 %v1394, %v1530
        %v1573 = vadd.f32 %v1395, %v1535
        %v1574 = vadd.f32 %v1396, %v1538
        %v1575 = vadd.f32 %v1397, %v1543
        %v1576 = vadd.f32 %v1398, %v1546
        %v1577 = vadd.f32 %v1399, %v1551
        %v1578 = vadd.f32 %v1400, %v1554
        %v1579 = vadd.f32 %v1401, %v1559
        %v1580 = vadd.f32 %v1402, %v1562
        %v1581 = vld [vmem:[%s1224 + $0x2] sm:$0xff]
        %v1582 = vld [vmem:[%s1224 + $0xa] sm:$0xff]
        %v1583 = vld [vmem:[%s1224 + $0x1a] sm:$0xff]
        %v1584 = vld [vmem:[%s1224 + $0x22] sm:$0xff]
        %v1585 = vld [vmem:[%s1224 + $0x32] sm:$0xff]
        %v1586 = vld [vmem:[%s1224 + $0x3a] sm:$0xff]
        %v1587 = vld [vmem:[%s1224 + $0x4a] sm:$0xff]
        %v1588 = vld [vmem:[%s1224 + $0x52] sm:$0xff]
        %v1589 = vld [vmem:[%s1224 + $0x62] sm:$0xff]
        %v1590 = vld [vmem:[%s1224 + $0x6a] sm:$0xff]
        %v1591 = vld [vmem:[%s1224 + $0x7a] sm:$0xff]
        %v1592 = vld [vmem:[%s1224 + $0x82] sm:$0xff]
        %v1593 = vld [vmem:[%s1224 + $0x92] sm:$0xff]
        %v1594 = vld [vmem:[%s1224 + $0x9a] sm:$0xff]
        %v1595 = vld [vmem:[%s1224 + $0xaa] sm:$0xff]
        %v1596 = vld [vmem:[%s1224 + $0xb2] sm:$0xff]
        %v1597 = vpack.c.bf16 %v1582, %v1581
        %v1598 = vpack.c.bf16 %v1584, %v1583
        %v1599 = vpack.c.bf16 %v1586, %v1585
        %v1600 = vpack.c.bf16 %v1588, %v1587
        %v1601 = vpack.c.bf16 %v1590, %v1589
        %v1602 = vpack.c.bf16 %v1592, %v1591
        %v1603 = vpack.c.bf16 %v1594, %v1593
        %v1604 = vpack.c.bf16 %v1596, %v1595
        %s1605 = scalar_lea.vmem %s1, 128
        %v1606 = vld [vmem:[%s1605] sm:$0xf]
        %v1607 = vld [vmem:[%s1605 + $0x4] sm:$0xf]
        %v1608 = vld [vmem:[%s1605 + $0x8] sm:$0xf]
        %v1609 = vld [vmem:[%s1605 + $0xc] sm:$0xf]
        %v1614 = vunpack.c.l.b16 %v1606
        %v1615 = vunpack.c.l.b16 %v1607
        %v1616 = vunpack.c.l.b16 %v1608
        %v1617 = vunpack.c.l.b16 %v1609
        %v1618 = vpack.c.b16 %v1615, %v1614
        %v1619 = vpack.c.b16 %v1617, %v1616
        %v1623 = vsel %vm252, %v1597, 0
        %v1626 = vsel %vm252, %v1598, 0
        %v1629 = vsel %vm252, %v1599, 0
        %v1632 = vsel %vm252, %v1600, 0
        %v1635 = vsel %vm252, %v1601, 0
        %v1638 = vsel %vm252, %v1602, 0
        %v1641 = vsel %vm252, %v1603, 0
        %v1644 = vsel %vm252, %v1604, 0
        %1646 = vmatprep.subr.bf16.mxu0 0
        %1647 = vmatpush1.bf16.msra.mxu0 %v1618
        %1648 = vmatprep.subr.bf16.mxu0 0
        %1649 = vmatpush1.bf16.msra.mxu0 %v1619
        %1650 = vmatprep.subr.bf16.mxu0 0
        %1651 = vmatpush1.bf16.msra.mxu0 0
        %1652 = vmatprep.subr.bf16.mxu0 0
        %1653 = vmatpush1.bf16.msra.mxu0 0
        %1654 = vmatprep.subr.bf16.mxu0 0
        %1655 = vmatpush1.bf16.msra.mxu0 0
        %1656 = vmatprep.subr.bf16.mxu0 0
        %1657 = vmatpush1.bf16.msra.mxu0 0
        %1658 = vmatprep.subr.bf16.mxu0 0
        %1659 = vmatpush1.bf16.msra.mxu0 0
        %1660 = vmatprep.subr.bf16.mxu0 0
        %1661 = vmatpush1.bf16.msra.mxu0 0
        %1662 = vmatprep.subr.bf16.mxu0 0
        %1663 = vmatpush1.bf16.msra.mxu0 0
        %1664 = vmatprep.subr.bf16.mxu0 0
        %1665 = vmatpush1.bf16.msra.mxu0 0
        %1666 = vmatprep.subr.bf16.mxu0 0
        %1667 = vmatpush1.bf16.msra.mxu0 0
        %1668 = vmatprep.subr.bf16.mxu0 0
        %1669 = vmatpush1.bf16.msra.mxu0 0
        %1670 = vmatprep.subr.bf16.mxu0 0
        %1671 = vmatpush1.bf16.msra.mxu0 0
        %1672 = vmatprep.subr.bf16.mxu0 0
        %1673 = vmatpush1.bf16.msra.mxu0 0
        %1674 = vmatprep.subr.bf16.mxu0 0
        %1675 = vmatpush1.bf16.msra.mxu0 0
        %1676 = vmatprep.subr.bf16.mxu0 0
        %1677 = vmatpush1.bf16.msra.mxu0 0
        %1678 = vmatprep.mubr.bf16.mxu0 0
        %1679 = vmatmul.mubr.bf16.gmra.mrb[0].mxu0 %v1623
        %v1680 = vpop.f32.mrb[0].mxu0
        %v1681 = vadd.f32 0.0, %v1680
        %v1682 = vpop.f32.mrb[0].mxu0
        %v1683 = vpop.f32.mrb[0].mxu0
        %v1684 = vadd.f32 0.0, %v1683
        %v1685 = vpop.f32.mrb[0].mxu0
        %1686 = vmatprep.mubr.bf16.mxu0 0
        %1687 = vmatmul.mubr.bf16.gmra.mrb[0].mxu0 %v1626
        %v1688 = vpop.f32.mrb[0].mxu0
        %v1689 = vadd.f32 0.0, %v1688
        %v1690 = vpop.f32.mrb[0].mxu0
        %v1691 = vpop.f32.mrb[0].mxu0
        %v1692 = vadd.f32 0.0, %v1691
        %v1693 = vpop.f32.mrb[0].mxu0
        %1694 = vmatprep.mubr.bf16.mxu0 0
        %1695 = vmatmul.mubr.bf16.gmra.mrb[0].mxu0 %v1629
        %v1696 = vpop.f32.mrb[0].mxu0
        %v1697 = vadd.f32 0.0, %v1696
        %v1698 = vpop.f32.mrb[0].mxu0
        %v1699 = vpop.f32.mrb[0].mxu0
        %v1700 = vadd.f32 0.0, %v1699
        %v1701 = vpop.f32.mrb[0].mxu0
        %1702 = vmatprep.mubr.bf16.mxu0 0
        %1703 = vmatmul.mubr.bf16.gmra.mrb[0].mxu0 %v1632
        %v1704 = vpop.f32.mrb[0].mxu0
        %v1705 = vadd.f32 0.0, %v1704
        %v1706 = vpop.f32.mrb[0].mxu0
        %v1707 = vpop.f32.mrb[0].mxu0
        %v1708 = vadd.f32 0.0, %v1707
        %v1709 = vpop.f32.mrb[0].mxu0
        %1710 = vmatprep.mubr.bf16.mxu0 0
        %1711 = vmatmul.mubr.bf16.gmra.mrb[0].mxu0 %v1635
        %v1712 = vpop.f32.mrb[0].mxu0
        %v1713 = vadd.f32 0.0, %v1712
        %v1714 = vpop.f32.mrb[0].mxu0
        %v1715 = vpop.f32.mrb[0].mxu0
        %v1716 = vadd.f32 0.0, %v1715
        %v1717 = vpop.f32.mrb[0].mxu0
        %1718 = vmatprep.mubr.bf16.mxu0 0
        %1719 = vmatmul.mubr.bf16.gmra.mrb[0].mxu0 %v1638
        %v1720 = vpop.f32.mrb[0].mxu0
        %v1721 = vadd.f32 0.0, %v1720
        %v1722 = vpop.f32.mrb[0].mxu0
        %v1723 = vpop.f32.mrb[0].mxu0
        %v1724 = vadd.f32 0.0, %v1723
        %v1725 = vpop.f32.mrb[0].mxu0
        %1726 = vmatprep.mubr.bf16.mxu0 0
        %1727 = vmatmul.mubr.bf16.gmra.mrb[0].mxu0 %v1641
        %v1728 = vpop.f32.mrb[0].mxu0
        %v1729 = vadd.f32 0.0, %v1728
        %v1730 = vpop.f32.mrb[0].mxu0
        %v1731 = vpop.f32.mrb[0].mxu0
        %v1732 = vadd.f32 0.0, %v1731
        %v1733 = vpop.f32.mrb[0].mxu0
        %1734 = vmatprep.mubr.bf16.mxu0 0
        %1735 = vmatmul.mubr.bf16.gmra.mrb[0].mxu0 %v1644
        %v1736 = vpop.f32.mrb[0].mxu0
        %v1737 = vadd.f32 0.0, %v1736
        %v1738 = vpop.f32.mrb[0].mxu0
        %v1739 = vpop.f32.mrb[0].mxu0
        %v1740 = vadd.f32 0.0, %v1739
        %v1741 = vpop.f32.mrb[0].mxu0
        %1742 = vdwg.mxu0
        %v1743 = vadd.f32 %v1565, %v1681
        %v1744 = vadd.f32 %v1566, %v1684
        %v1745 = vadd.f32 %v1567, %v1689
        %v1746 = vadd.f32 %v1568, %v1692
        %v1747 = vadd.f32 %v1569, %v1697
        %v1748 = vadd.f32 %v1570, %v1700
        %v1749 = vadd.f32 %v1571, %v1705
        %v1750 = vadd.f32 %v1572, %v1708
        %v1751 = vadd.f32 %v1573, %v1713
        %v1752 = vadd.f32 %v1574, %v1716
        %v1753 = vadd.f32 %v1575, %v1721
        %v1754 = vadd.f32 %v1576, %v1724
        %v1755 = vadd.f32 %v1577, %v1729
        %v1756 = vadd.f32 %v1578, %v1732
        %v1757 = vadd.f32 %v1579, %v1737
        %v1758 = vadd.f32 %v1580, %v1740
        %1759 = vxpose.xlu0.b32.start [1/16] %v1743, 128
        %1760 = vxpose.xlu0.b32.cont [2/16] %v1744, 128
        %1761 = vxpose.xlu0.b32.cont [3/16] %v1745, 128
        %1762 = vxpose.xlu0.b32.cont [4/16] %v1746, 128
        %1763 = vxpose.xlu0.b32.cont [5/16] %v1747, 128
        %1764 = vxpose.xlu0.b32.cont [6/16] %v1748, 128
        %1765 = vxpose.xlu0.b32.cont [7/16] %v1749, 128
        %1766 = vxpose.xlu0.b32.cont [8/16] %v1750, 128
        %1767 = vxpose.xlu0.b32.cont [9/16] %v1751, 128
        %1768 = vxpose.xlu0.b32.cont [10/16] %v1752, 128
        %1769 = vxpose.xlu0.b32.cont [11/16] %v1753, 128
        %1770 = vxpose.xlu0.b32.cont [12/16] %v1754, 128
        %1771 = vxpose.xlu0.b32.cont [13/16] %v1755, 128
        %1772 = vxpose.xlu0.b32.cont [14/16] %v1756, 128
        %1773 = vxpose.xlu0.b32.cont [15/16] %v1757, 128
        %1774 = vxpose.xlu0.b32.end [16/16] %v1758, 128
        %v1775 = vpop.trf.xlu0
        %v1776 = vpop.trf.xlu0
        %v1777 = vpop.trf.xlu0
        %v1778 = vpop.trf.xlu0
        %v1779 = vpop.trf.xlu0
        %v1780 = vpop.trf.xlu0
        %v1781 = vpop.trf.xlu0
        %v1782 = vpop.trf.xlu0
        %v1783 = vpop.trf.xlu0
        %v1784 = vpop.trf.xlu0
        %v1785 = vpop.trf.xlu0
        %v1786 = vpop.trf.xlu0
        %v1787 = vpop.trf.xlu0
        %v1788 = vpop.trf.xlu0
        %v1789 = vpop.trf.xlu0
        %v1790 = vpop.trf.xlu0
        %v1791 = vld [vmem:[%s2] sm:$0xff]
        %v1792 = vld [vmem:[%s2 + $0x8] sm:$0xff]
        %v1793 = vld [vmem:[%s2 + $0x10] sm:$0xff]
        %v1794 = vld [vmem:[%s2 + $0x18] sm:$0xff]
        %v1795 = vld [vmem:[%s2 + $0x20] sm:$0xff]
        %v1796 = vld [vmem:[%s2 + $0x28] sm:$0xff]
        %v1797 = vld [vmem:[%s2 + $0x30] sm:$0xff]
        %v1798 = vld [vmem:[%s2 + $0x38] sm:$0xff]
        %1800 = vset.pattern.permute.xlu0 0
        %1801 = vperm.xlu0 %1800, %v1791
        %v1802 = vpop.permute.xlu0 %1801
        %1805 = vset.pattern.permute.xlu0 0
        %1806 = vperm.xlu0 %1805, %v1792
        %v1807 = vpop.permute.xlu0 %1806
        %1810 = vset.pattern.permute.xlu0 0
        %1811 = vperm.xlu0 %1810, %v1793
        %v1812 = vpop.permute.xlu0 %1811
        %1815 = vset.pattern.permute.xlu0 0
        %1816 = vperm.xlu0 %1815, %v1794
        %v1817 = vpop.permute.xlu0 %1816
        %1820 = vset.pattern.permute.xlu0 0
        %1821 = vperm.xlu0 %1820, %v1795
        %v1822 = vpop.permute.xlu0 %1821
        %1825 = vset.pattern.permute.xlu0 0
        %1826 = vperm.xlu0 %1825, %v1796
        %v1827 = vpop.permute.xlu0 %1826
        %1830 = vset.pattern.permute.xlu0 0
        %1831 = vperm.xlu0 %1830, %v1797
        %v1832 = vpop.permute.xlu0 %1831
        %1835 = vset.pattern.permute.xlu0 0
        %1836 = vperm.xlu0 %1835, %v1798
        %v1837 = vpop.permute.xlu0 %1836
        %v1839 = vadd.f32 %v1775, %v1802
        %v1840 = vadd.f32 %v1776, %v1807
        %v1841 = vadd.f32 %v1777, %v1812
        %v1842 = vadd.f32 %v1778, %v1817
        %v1843 = vadd.f32 %v1779, %v1822
        %v1844 = vadd.f32 %v1780, %v1827
        %v1845 = vadd.f32 %v1781, %v1832
        %v1846 = vadd.f32 %v1782, %v1837
        %v1847 = vmax.f32 %v1839, 0.0
        %v1848 = vmax.f32 %v1840, 0.0
        %v1849 = vmax.f32 %v1841, 0.0
        %v1850 = vmax.f32 %v1842, 0.0
        %v1851 = vmax.f32 %v1843, 0.0
        %v1852 = vmax.f32 %v1844, 0.0
        %v1853 = vmax.f32 %v1845, 0.0
        %v1854 = vmax.f32 %v1846, 0.0
        %1855 = vst [vmem:[%s173] sm:$0xff] %v1847
        %1856 = vst [vmem:[%s173 + $0x8] sm:$0xff] %v1848
        %1857 = vst [vmem:[%s173 + $0x10] sm:$0xff] %v1849
        %1858 = vst [vmem:[%s173 + $0x18] sm:$0xff] %v1850
        %1859 = vst [vmem:[%s173 + $0x20] sm:$0xff] %v1851
        %1860 = vst [vmem:[%s173 + $0x28] sm:$0xff] %v1852
        %1861 = vst [vmem:[%s173 + $0x30] sm:$0xff] %v1853
        %1862 = vst [vmem:[%s173 + $0x38] sm:$0xff] %v1854
        %s1863 = sand.u32 %s104, 1
        %s1864 = sand.u32 %s104, 1
        %s1865 = smul.addr %s1864, 64
        %s1866 = scalar_lea.vmem [#allocation2], %s1865
        // Predicated region
        $region33: #{cnn_layer_forward.1} parent=31 // pred_check
          %p1867 = pneg %p114
        $region34: #{cnn_layer_forward.1} parent=31 // pred_check_branch
          %1869 = sbr.rel (%p1867) target = $region36
        $region35: #{cnn_layer_forward.1} parent=31 // pred_region
          %s1870 = smul.addr %s18, 16
          %s1871 = sadd.s32 %s19, %s1870
          %s1872 = smul.addr %s1871, 8
          %s1873 = scalar_lea.vmem %s3, %s1872
          // Predicated region
          $region37: #{cnn_layer_forward.1} parent=35 // pred_check
            _
          $region38: #{cnn_layer_forward.1} parent=35 // pred_check_branch
            %1875 = sbr.rel (0) target = $region40
          $region39: #{cnn_layer_forward.1} parent=35 // pred_region
            // Predicated region
            $region41: #{cnn_layer_forward.1} parent=39 // pred_check
              _
            $region42: #{cnn_layer_forward.1} parent=39 // pred_check_branch
              %1877 = sbr.rel (0) target = $region44
            $region43: #{cnn_layer_forward.1} parent=39 // pred_region
              // Predicated region
              $region56: #{cnn_layer_forward.1} parent=43 // pred_check
                _
              $region57: #{cnn_layer_forward.1} parent=43 // pred_check_branch
                %1906 = sbr.rel (0) target = $region59
              $region58: #{cnn_layer_forward.1} parent=43 // pred_region
                loop: start=0, step=1, limit=1
                $region60: #{cnn_layer_forward.1} parent=58 // loop_pre_header
                  _
                $region61: #{cnn_layer_forward.1} parent=58 // loop_header
                  %s1908 = sphi 0, %s1912
                  %p1909 = scmp.ge.s32.totalorder %s1908, 1
                  %s1913 = sphi %s1866, %s1866
                  %s1914 = sphi %s1873, %s1873
                $region62: #{cnn_layer_forward.1} parent=58 // loop_header_branch
                  %1911 = sbr.rel (%p1909) target = $region66
                $region63: #{cnn_layer_forward.1} parent=58 // loop_body
                  %v1915 = vld [vmem:[%s1913] sm:$0xff]
                  %1916 = vst [vmem:[%s1914] sm:$0xff] %v1915
                  %v1917 = vld [vmem:[%s1913 + $0x8] sm:$0xff]
                  %1918 = vst [vmem:[%s1914 + $0x10] sm:$0xff] %v1917
                  %v1919 = vld [vmem:[%s1913 + $0x10] sm:$0xff]
                  %1920 = vst [vmem:[%s1914 + $0x20] sm:$0xff] %v1919
                  %v1921 = vld [vmem:[%s1913 + $0x18] sm:$0xff]
                  %1922 = vst [vmem:[%s1914 + $0x30] sm:$0xff] %v1921
                  %v1923 = vld [vmem:[%s1913 + $0x20] sm:$0xff]
                  %1924 = vst [vmem:[%s1914 + $0x40] sm:$0xff] %v1923
                  %v1925 = vld [vmem:[%s1913 + $0x28] sm:$0xff]
                  %1926 = vst [vmem:[%s1914 + $0x50] sm:$0xff] %v1925
                  %v1927 = vld [vmem:[%s1913 + $0x30] sm:$0xff]
                  %1928 = vst [vmem:[%s1914 + $0x60] sm:$0xff] %v1927
                  %v1929 = vld [vmem:[%s1913 + $0x38] sm:$0xff]
                  %1930 = vst [vmem:[%s1914 + $0x70] sm:$0xff] %v1929
                $region64: #{cnn_layer_forward.1} parent=58 // loop_footer
                  %s1912 = sadd.s32 1, %s1908
                $region65: #{cnn_layer_forward.1} parent=58 // loop_footer_branch
                  %1907 = sbr.rel target = $region61
                $region66: #{cnn_layer_forward.1} parent=58 // loop_exit
                  _
              $region59: #{cnn_layer_forward.1} parent=43 // pred_fallthru
                _
              // Predicated region
              $region67: #{cnn_layer_forward.1} parent=43 // pred_check
                _
              $region68: #{cnn_layer_forward.1} parent=43 // pred_check_branch
                %1932 = sbr.rel target = $region70
              $region69: #{cnn_layer_forward.1} parent=43 // pred_region
                _
              $region70: #{cnn_layer_forward.1} parent=43 // pred_fallthru
                _
            $region44: #{cnn_layer_forward.1} parent=39 // pred_fallthru
              _
            // Predicated region
            $region45: #{cnn_layer_forward.1} parent=39 // pred_check
              _
            $region46: #{cnn_layer_forward.1} parent=39 // pred_check_branch
              %1879 = sbr.rel target = $region48
            $region47: #{cnn_layer_forward.1} parent=39 // pred_region
              loop: start=0, step=1, limit=1
              $region49: #{cnn_layer_forward.1} parent=47 // loop_pre_header
                _
              $region50: #{cnn_layer_forward.1} parent=47 // loop_header
                %s1882 = sphi 0, %s1886
                %p1883 = scmp.ge.s32.totalorder %s1882, 1
                %s1887 = sphi %s1866, %s1866
                %s1888 = sphi %s1873, %s1873
              $region51: #{cnn_layer_forward.1} parent=47 // loop_header_branch
                %1885 = sbr.rel (%p1883) target = $region55
              $region52: #{cnn_layer_forward.1} parent=47 // loop_body
                %v1889 = vld [vmem:[%s1887] sm:$0xff]
                %1890 = vst [vmem:[%s1888] sm:$0xff] %v1889
                %v1891 = vld [vmem:[%s1887 + $0x8] sm:$0xff]
                %1892 = vst [vmem:[%s1888 + $0x10] sm:$0xff] %v1891
                %v1893 = vld [vmem:[%s1887 + $0x10] sm:$0xff]
                %1894 = vst [vmem:[%s1888 + $0x20] sm:$0xff] %v1893
                %v1895 = vld [vmem:[%s1887 + $0x18] sm:$0xff]
                %1896 = vst [vmem:[%s1888 + $0x30] sm:$0xff] %v1895
                %v1897 = vld [vmem:[%s1887 + $0x20] sm:$0xff]
                %1898 = vst [vmem:[%s1888 + $0x40] sm:$0xff] %v1897
                %v1899 = vld [vmem:[%s1887 + $0x28] sm:$0xff]
                %1900 = vst [vmem:[%s1888 + $0x50] sm:$0xff] %v1899
                %v1901 = vld [vmem:[%s1887 + $0x30] sm:$0xff]
                %1902 = vst [vmem:[%s1888 + $0x60] sm:$0xff] %v1901
                %v1903 = vld [vmem:[%s1887 + $0x38] sm:$0xff]
                %1904 = vst [vmem:[%s1888 + $0x70] sm:$0xff] %v1903
              $region53: #{cnn_layer_forward.1} parent=47 // loop_footer
                %s1886 = sadd.s32 1, %s1882
              $region54: #{cnn_layer_forward.1} parent=47 // loop_footer_branch
                %1881 = sbr.rel target = $region50
              $region55: #{cnn_layer_forward.1} parent=47 // loop_exit
                _
            $region48: #{cnn_layer_forward.1} parent=39 // pred_fallthru
              _
          $region40: #{cnn_layer_forward.1} parent=35 // pred_fallthru
            _
          %1933 = vnop
        $region36: #{cnn_layer_forward.1} parent=31 // pred_fallthru
          _
      $region32: #{cnn_layer_forward.1} parent=5 // pred_fallthru
        _
      %p1934 = scmp.le.s32.totalorder 2, %s9
      // Predicated region
      $region71: #{cnn_layer_forward.1} parent=5 // pred_check
        %p1935 = pneg %p1934
      $region72: #{cnn_layer_forward.1} parent=5 // pred_check_branch
        %1937 = sbr.rel (%p1935) target = $region74
      $region73: #{cnn_layer_forward.1} parent=5 // pred_region
        %s1938 = ssub.s32 %s9, 2
        // Predicated region
        $region75: #{cnn_layer_forward.1} parent=73 // pred_check
          %p1939 = pneg %p120
        $region76: #{cnn_layer_forward.1} parent=73 // pred_check_branch
          %1941 = sbr.rel (%p1939) target = $region78
        $region77: #{cnn_layer_forward.1} parent=73 // pred_region
          %s1942 = sand.u32 %s105, 1
          %s1943 = sand.u32 %s105, 1
          %s1944 = smul.addr %s1943, 64
          %s1945 = scalar_lea.vmem [#allocation2], %s1944
        $region78: #{cnn_layer_forward.1} parent=73 // pred_fallthru
          _
      $region74: #{cnn_layer_forward.1} parent=5 // pred_fallthru
        _
    $region6: #{cnn_layer_forward.1} parent=1 // loop_footer
      %s13 = sadd.s32 1, %s9
    $region7: #{cnn_layer_forward.1} parent=1 // loop_footer_branch
      %8 = sbr.rel target = $region3
    $region8: #{cnn_layer_forward.1} parent=1 // loop_exit
      _

</llo_original>
